<compile_context>
chip_gen: v7x
topology: tpu7x:2x2x1
jax: 0.10.0
libtpu: 0.0.40
codegen_flags: <defaults>
</compile_context>

<pallas_src>
import jax
import jax.numpy as jnp
import numpy as np
from jax import lax
from jax.experimental import pallas as pl
from jax.experimental.pallas import tpu as pltpu


def _sepconv_kernel(xm_ref, xh0_ref, xh1_ref, w_ref, b_ref, o_ref):
    """One (batch, H-strip) tile.

    xm_ref : (1, TH, W+2, Cin)   main rows of the zero-padded NHWC input
    xh0_ref: (1, 1,  W+2, Cin)   halo row TH   of the strip
    xh1_ref: (1, 1,  W+2, Cin)   halo row TH+1 of the strip
    w_ref  : (9, Cin, Cout)      fused depthwise*pointwise weights
    b_ref  : (1, Cout)           fused bias (f32)
    o_ref  : (1, Cout, TH*W)     NCHW-flattened output strip
    """
    th = xm_ref.shape[1]
    w_out = xm_ref.shape[2] - 2
    cin = xm_ref.shape[3]
    cout = o_ref.shape[1]

    # Full (TH+2)-row padded strip (concat along the cheap leading axis).
    strip = jnp.concatenate([xm_ref[0], xh0_ref[0], xh1_ref[0]], axis=0)  # (TH+2, W+2, Cin)

    # Hoist the 3 kw-shifted (sublane-axis) views once; kh shifts below are
    # cheap outer-dim slices reused across taps.
    xw = [strip[:, kw:kw + w_out, :] for kw in range(3)]  # each (TH+2, W, Cin)

    acc = jnp.zeros((th * w_out, cout), jnp.float32)
    for kh in range(3):
        for kw in range(3):
            tap = xw[kw][kh:kh + th].reshape(th * w_out, cin)   # model dtype operand
            acc = acc + jnp.dot(tap, w_ref[kh * 3 + kw],
                                preferred_element_type=jnp.float32)
    acc = acc + b_ref[...].astype(jnp.float32)

    # NCHW writeback: (TH*W, Cout) -> (Cout, TH*W); lane-dense since TH*W % 128 == 0.
    o_ref[...] = jnp.transpose(acc, (1, 0)).astype(o_ref.dtype)[None]


def _round_up(v, m):
    return -(-v // m) * m


def _est_step_vmem(th, W, Cin, Cout, itemsize):
    """Rough per-grid-step VMEM footprint (vreg-tile padded), bytes."""
    row = _round_up(W + 2, 8) * _round_up(Cin, 128) * itemsize       # one padded NHWC row
    in_blk = (th + 2) * row                                          # main + halo rows
    out_blk = _round_up(Cout, 8) * _round_up(th * W, 128) * itemsize
    strip_work = 4 * (th + 2) * row                                  # strip + 3 kw views
    acc = _round_up(th * W, 8) * _round_up(Cout, 128) * 4
    return 2 * (in_blk + out_blk) + strip_work + acc                 # x2: double buffering


def _pick_th(H, W, Cin, Cout, itemsize, budget_bytes=12 * 1024 * 1024):
    """Largest H-strip height dividing H that keeps the output lane-dense and
    fits the per-step VMEM budget (conservative for v7x's 64 MiB/TC)."""
    cands = [t for t in range(1, H + 1)
             if H % t == 0 and (t == H or (t * W) % 128 == 0)]
    fitting = [t for t in cands
               if _est_step_vmem(t, W, Cin, Cout, itemsize) <= budget_bytes]
    return max(fitting) if fitting else min(cands)


def sepconv2d(x_nchw, dw_w, dw_b, pw_w, pw_b, th=None):
    """x_nchw: (N, Cin, H, W); returns (N, Cout, H, W).

    dw_w: (Cin, 1, 3, 3)   (PyTorch depthwise Conv2d weight layout)
    dw_b: (Cin,)
    pw_w: (Cout, Cin, 1, 1)
    pw_b: (Cout,)
    """
    N, Cin, H, W = x_nchw.shape
    Cout = pw_w.shape[0]
    dtype = x_nchw.dtype
    itemsize = np.dtype(dtype).itemsize

    if th is None:
        th = _pick_th(H, W, Cin, Cout, itemsize)
    if H % th != 0 or not (th == H or (th * W) % 128 == 0):
        raise ValueError(f"th={th} must divide H={H} and keep th*W a multiple of 128")

    # Layout plumbing: NCHW -> NHWC plus the padding=1 zero-pad of the 3x3 conv.
    # TODO(synk): keep the surrounding model NHWC end-to-end to drop this HBM pass.
    x_pad = jnp.pad(jnp.transpose(x_nchw, (0, 2, 3, 1)),
                    ((0, 0), (1, 1), (1, 1), (0, 0)))

    # Fuse depthwise into the pointwise: one (9, Cin, Cout) weight + one bias.
    dww = jnp.transpose(dw_w[:, 0, :, :].astype(jnp.float32), (1, 2, 0)).reshape(9, Cin)
    pww = jnp.transpose(pw_w[:, :, 0, 0].astype(jnp.float32), (1, 0))          # (Cin, Cout)
    w_eff = (dww[:, :, None] * pww[None, :, :]).astype(dtype)                  # (9, Cin, Cout)
    b_eff = (dw_b.astype(jnp.float32) @ pww
             + pw_b.astype(jnp.float32)).reshape(1, Cout)                      # (1, Cout) f32

    out_flat = pl.pallas_call(
        _sepconv_kernel,
        out_shape=jax.ShapeDtypeStruct((N, Cout, H * W), dtype),
        grid_spec=pltpu.PrefetchScalarGridSpec(
            num_scalar_prefetch=0,
            grid=(N, H // th),
            in_specs=[
                # Main TH rows of the padded strip.
                pl.BlockSpec((1, th, W + 2, Cin), lambda n, h: (n, h, 0, 0)),
                # 2-row halo fetched as two 1-row blocks (block size 1 => block
                # index == element row index; works for any TH dividing H).
                pl.BlockSpec((1, 1, W + 2, Cin), lambda n, h: (n, (h + 1) * th, 0, 0)),
                pl.BlockSpec((1, 1, W + 2, Cin), lambda n, h: (n, (h + 1) * th + 1, 0, 0)),
                # Fused weights / bias: constant index maps -> stay resident.
                pl.BlockSpec((9, Cin, Cout), lambda n, h: (0, 0, 0)),
                pl.BlockSpec((1, Cout), lambda n, h: (0, 0)),
            ],
            out_specs=pl.BlockSpec((1, Cout, th * W), lambda n, h: (n, 0, h)),
        ),
        compiler_params=pltpu.CompilerParams(
            dimension_semantics=("parallel", "parallel"),
            vmem_limit_bytes=48 * 1024 * 1024,
        ),
    )(x_pad, x_pad, x_pad, w_eff, b_eff)

    # Free (metadata-only) reshape back to NCHW — no post-kernel transpose.
    return out_flat.reshape(N, Cout, H, W)


def _reference(x_nchw, dw_w, dw_b, pw_w, pw_b):
    """Pure-JAX reference matching PyTorch Conv2d semantics (NCHW)."""
    Cin = x_nchw.shape[1]
    y = lax.conv_general_dilated(
        x_nchw, dw_w, window_strides=(1, 1), padding=((1, 1), (1, 1)),
        dimension_numbers=("NCHW", "OIHW", "NCHW"),
        feature_group_count=Cin)
    y = y + dw_b.reshape(1, -1, 1, 1)
    z = lax.conv_general_dilated(
        y, pw_w, window_strides=(1, 1), padding=((0, 0), (0, 0)),
        dimension_numbers=("NCHW", "OIHW", "NCHW"))
    z = z + pw_b.reshape(1, -1, 1, 1)
    return z


if __name__ == "__main__":
    N, Cin, Cout, H, W = 2, 4, 8, 16, 16

    key = jax.random.PRNGKey(0)
    kx, kdw, kdb, kpw, kpb = jax.random.split(key, 5)

    x = jax.random.normal(kx, (N, Cin, H, W), dtype=jnp.float32)

    # Deterministic parameter init (shapes from nn.Conv2d in __init__).
    dw_w = jax.random.normal(kdw, (Cin, 1, 3, 3), dtype=jnp.float32) * 0.1
    dw_b = jax.random.normal(kdb, (Cin,), dtype=jnp.float32) * 0.1
    pw_w = jax.random.normal(kpw, (Cout, Cin, 1, 1), dtype=jnp.float32) * 0.1
    pw_b = jax.random.normal(kpb, (Cout,), dtype=jnp.float32) * 0.1

    ref = jax.block_until_ready(_reference(x, dw_w, dw_b, pw_w, pw_b))

    # Strip-tiled path (TH=8 -> grid (2, 2)); exercises the halo logic.
    out_strip = jax.block_until_ready(sepconv2d(x, dw_w, dw_b, pw_w, pw_b, th=8))
    np.testing.assert_allclose(np.asarray(out_strip), np.asarray(ref),
                               rtol=1e-5, atol=2e-5)

    # Auto-tiled path (picks TH=H at this tiny shape -> grid (2, 1)).
    out_auto = jax.block_until_ready(sepconv2d(x, dw_w, dw_b, pw_w, pw_b))
    np.testing.assert_allclose(np.asarray(out_auto), np.asarray(ref),
                               rtol=1e-5, atol=2e-5)

    print("KERNEL_OK")
</pallas_src>

<mosaic_0001>
module attributes {stable_mosaic.version = 11 : i64} {
  func.func @_sepconv_kernel(%arg0: i32, %arg1: i32, %arg2: memref<1x8x18x4xf32, #tpu.memory_space<vmem>>, %arg3: memref<1x1x18x4xf32, #tpu.memory_space<vmem>>, %arg4: memref<1x1x18x4xf32, #tpu.memory_space<vmem>>, %arg5: memref<9x4x8xf32, #tpu.memory_space<vmem>>, %arg6: memref<1x8xf32, #tpu.memory_space<vmem>>, %arg7: memref<1x8x128xf32, #tpu.memory_space<vmem>>) attributes {dimension_semantics = [#tpu.dimension_semantics<parallel>, #tpu.dimension_semantics<parallel>], iteration_bounds = array<i64: 2, 2>, scalar_prefetch = 0 : i64, scratch_operands = 0 : i64, tpu.core_type = #tpu.core_type<tc>, window_params = [{transform_indices = @transform_0, window_bounds = array<i64: 1, 8, 18, 4>}, {transform_indices = @transform_1, window_bounds = array<i64: 1, 1, 18, 4>}, {transform_indices = @transform_2, window_bounds = array<i64: 1, 1, 18, 4>}, {pipeline_mode = #tpu.pipeline_mode<synchronous>, transform_indices = @transform_3, window_bounds = array<i64: 9, 4, 8>}, {pipeline_mode = #tpu.pipeline_mode<synchronous>, transform_indices = @transform_4, window_bounds = array<i64: 1, 8>}, {transform_indices = @transform_5, window_bounds = array<i64: 1, 8, 128>}]} {
    %c0 = arith.constant 0 : index
    %c0_0 = arith.constant 0 : index
    %c0_1 = arith.constant 0 : index
    %c0_2 = arith.constant 0 : index
    %0 = vector.load %arg2[%c0, %c0_0, %c0_1, %c0_2] : memref<1x8x18x4xf32, #tpu.memory_space<vmem>>, vector<1x8x18x4xf32>
    %1 = vector.shape_cast %0 : vector<1x8x18x4xf32> to vector<8x18x4xf32>
    %c0_3 = arith.constant 0 : index
    %c0_4 = arith.constant 0 : index
    %c0_5 = arith.constant 0 : index
    %c0_6 = arith.constant 0 : index
    %2 = vector.load %arg3[%c0_3, %c0_4, %c0_5, %c0_6] : memref<1x1x18x4xf32, #tpu.memory_space<vmem>>, vector<1x1x18x4xf32>
    %3 = vector.shape_cast %2 : vector<1x1x18x4xf32> to vector<1x18x4xf32>
    %c0_7 = arith.constant 0 : index
    %c0_8 = arith.constant 0 : index
    %c0_9 = arith.constant 0 : index
    %c0_10 = arith.constant 0 : index
    %4 = vector.load %arg4[%c0_7, %c0_8, %c0_9, %c0_10] : memref<1x1x18x4xf32, #tpu.memory_space<vmem>>, vector<1x1x18x4xf32>
    %5 = vector.shape_cast %4 : vector<1x1x18x4xf32> to vector<1x18x4xf32>
    %6 = tpu.concatenate %1, %3, %5 in 0 : vector<8x18x4xf32>, vector<1x18x4xf32>, vector<1x18x4xf32> -> vector<10x18x4xf32>
    %7 = vector.extract_strided_slice %6 {offsets = [0, 0, 0], sizes = [10, 16, 4], strides = [1, 1, 1]} : vector<10x18x4xf32> to vector<10x16x4xf32>
    %8 = vector.extract_strided_slice %6 {offsets = [0, 1, 0], sizes = [10, 16, 4], strides = [1, 1, 1]} : vector<10x18x4xf32> to vector<10x16x4xf32>
    %9 = vector.extract_strided_slice %6 {offsets = [0, 2, 0], sizes = [10, 16, 4], strides = [1, 1, 1]} : vector<10x18x4xf32> to vector<10x16x4xf32>
    %cst = arith.constant 0.000000e+00 : f32
    %10 = vector.broadcast %cst : f32 to vector<128x8xf32>
    %11 = vector.extract_strided_slice %7 {offsets = [0, 0, 0], sizes = [8, 16, 4], strides = [1, 1, 1]} : vector<10x16x4xf32> to vector<8x16x4xf32>
    %12 = vector.shape_cast %11 : vector<8x16x4xf32> to vector<128x4xf32>
    %c0_11 = arith.constant 0 : index
    %c0_12 = arith.constant 0 : index
    %c0_13 = arith.constant 0 : index
    %13 = vector.load %arg5[%c0_11, %c0_12, %c0_13] : memref<9x4x8xf32, #tpu.memory_space<vmem>>, vector<1x4x8xf32>
    %14 = vector.shape_cast %13 : vector<1x4x8xf32> to vector<4x8xf32>
    %cst_14 = arith.constant dense<0.000000e+00> : vector<128x8xf32>
    %15 = tpu.matmul %12, %14, %cst_14 {dimension_numbers = #tpu.dot_dimension_numbers<[1], [0], [0], [1], [0, 0, 1, 1], [], []>} : vector<128x4xf32>, vector<4x8xf32>, vector<128x8xf32> -> vector<128x8xf32>
    %16 = arith.addf %10, %15 : vector<128x8xf32>
    %17 = vector.extract_strided_slice %8 {offsets = [0, 0, 0], sizes = [8, 16, 4], strides = [1, 1, 1]} : vector<10x16x4xf32> to vector<8x16x4xf32>
    %18 = vector.shape_cast %17 : vector<8x16x4xf32> to vector<128x4xf32>
    %c1 = arith.constant 1 : index
    %c0_15 = arith.constant 0 : index
    %c0_16 = arith.constant 0 : index
    %19 = vector.load %arg5[%c1, %c0_15, %c0_16] : memref<9x4x8xf32, #tpu.memory_space<vmem>>, vector<1x4x8xf32>
    %20 = vector.shape_cast %19 : vector<1x4x8xf32> to vector<4x8xf32>
    %cst_17 = arith.constant dense<0.000000e+00> : vector<128x8xf32>
    %21 = tpu.matmul %18, %20, %cst_17 {dimension_numbers = #tpu.dot_dimension_numbers<[1], [0], [0], [1], [0, 0, 1, 1], [], []>} : vector<128x4xf32>, vector<4x8xf32>, vector<128x8xf32> -> vector<128x8xf32>
    %22 = arith.addf %16, %21 : vector<128x8xf32>
    %23 = vector.extract_strided_slice %9 {offsets = [0, 0, 0], sizes = [8, 16, 4], strides = [1, 1, 1]} : vector<10x16x4xf32> to vector<8x16x4xf32>
    %24 = vector.shape_cast %23 : vector<8x16x4xf32> to vector<128x4xf32>
    %c2 = arith.constant 2 : index
    %c0_18 = arith.constant 0 : index
    %c0_19 = arith.constant 0 : index
    %25 = vector.load %arg5[%c2, %c0_18, %c0_19] : memref<9x4x8xf32, #tpu.memory_space<vmem>>, vector<1x4x8xf32>
    %26 = vector.shape_cast %25 : vector<1x4x8xf32> to vector<4x8xf32>
    %cst_20 = arith.constant dense<0.000000e+00> : vector<128x8xf32>
    %27 = tpu.matmul %24, %26, %cst_20 {dimension_numbers = #tpu.dot_dimension_numbers<[1], [0], [0], [1], [0, 0, 1, 1], [], []>} : vector<128x4xf32>, vector<4x8xf32>, vector<128x8xf32> -> vector<128x8xf32>
    %28 = arith.addf %22, %27 : vector<128x8xf32>
    %29 = vector.extract_strided_slice %7 {offsets = [1, 0, 0], sizes = [8, 16, 4], strides = [1, 1, 1]} : vector<10x16x4xf32> to vector<8x16x4xf32>
    %30 = vector.shape_cast %29 : vector<8x16x4xf32> to vector<128x4xf32>
    %c3 = arith.constant 3 : index
    %c0_21 = arith.constant 0 : index
    %c0_22 = arith.constant 0 : index
    %31 = vector.load %arg5[%c3, %c0_21, %c0_22] : memref<9x4x8xf32, #tpu.memory_space<vmem>>, vector<1x4x8xf32>
    %32 = vector.shape_cast %31 : vector<1x4x8xf32> to vector<4x8xf32>
    %cst_23 = arith.constant dense<0.000000e+00> : vector<128x8xf32>
    %33 = tpu.matmul %30, %32, %cst_23 {dimension_numbers = #tpu.dot_dimension_numbers<[1], [0], [0], [1], [0, 0, 1, 1], [], []>} : vector<128x4xf32>, vector<4x8xf32>, vector<128x8xf32> -> vector<128x8xf32>
    %34 = arith.addf %28, %33 : vector<128x8xf32>
    %35 = vector.extract_strided_slice %8 {offsets = [1, 0, 0], sizes = [8, 16, 4], strides = [1, 1, 1]} : vector<10x16x4xf32> to vector<8x16x4xf32>
    %36 = vector.shape_cast %35 : vector<8x16x4xf32> to vector<128x4xf32>
    %c4 = arith.constant 4 : index
    %c0_24 = arith.constant 0 : index
    %c0_25 = arith.constant 0 : index
    %37 = vector.load %arg5[%c4, %c0_24, %c0_25] : memref<9x4x8xf32, #tpu.memory_space<vmem>>, vector<1x4x8xf32>
    %38 = vector.shape_cast %37 : vector<1x4x8xf32> to vector<4x8xf32>
    %cst_26 = arith.constant dense<0.000000e+00> : vector<128x8xf32>
    %39 = tpu.matmul %36, %38, %cst_26 {dimension_numbers = #tpu.dot_dimension_numbers<[1], [0], [0], [1], [0, 0, 1, 1], [], []>} : vector<128x4xf32>, vector<4x8xf32>, vector<128x8xf32> -> vector<128x8xf32>
    %40 = arith.addf %34, %39 : vector<128x8xf32>
    %41 = vector.extract_strided_slice %9 {offsets = [1, 0, 0], sizes = [8, 16, 4], strides = [1, 1, 1]} : vector<10x16x4xf32> to vector<8x16x4xf32>
    %42 = vector.shape_cast %41 : vector<8x16x4xf32> to vector<128x4xf32>
    %c5 = arith.constant 5 : index
    %c0_27 = arith.constant 0 : index
    %c0_28 = arith.constant 0 : index
    %43 = vector.load %arg5[%c5, %c0_27, %c0_28] : memref<9x4x8xf32, #tpu.memory_space<vmem>>, vector<1x4x8xf32>
    %44 = vector.shape_cast %43 : vector<1x4x8xf32> to vector<4x8xf32>
    %cst_29 = arith.constant dense<0.000000e+00> : vector<128x8xf32>
    %45 = tpu.matmul %42, %44, %cst_29 {dimension_numbers = #tpu.dot_dimension_numbers<[1], [0], [0], [1], [0, 0, 1, 1], [], []>} : vector<128x4xf32>, vector<4x8xf32>, vector<128x8xf32> -> vector<128x8xf32>
    %46 = arith.addf %40, %45 : vector<128x8xf32>
    %47 = vector.extract_strided_slice %7 {offsets = [2, 0, 0], sizes = [8, 16, 4], strides = [1, 1, 1]} : vector<10x16x4xf32> to vector<8x16x4xf32>
    %48 = vector.shape_cast %47 : vector<8x16x4xf32> to vector<128x4xf32>
    %c6 = arith.constant 6 : index
    %c0_30 = arith.constant 0 : index
    %c0_31 = arith.constant 0 : index
    %49 = vector.load %arg5[%c6, %c0_30, %c0_31] : memref<9x4x8xf32, #tpu.memory_space<vmem>>, vector<1x4x8xf32>
    %50 = vector.shape_cast %49 : vector<1x4x8xf32> to vector<4x8xf32>
    %cst_32 = arith.constant dense<0.000000e+00> : vector<128x8xf32>
    %51 = tpu.matmul %48, %50, %cst_32 {dimension_numbers = #tpu.dot_dimension_numbers<[1], [0], [0], [1], [0, 0, 1, 1], [], []>} : vector<128x4xf32>, vector<4x8xf32>, vector<128x8xf32> -> vector<128x8xf32>
    %52 = arith.addf %46, %51 : vector<128x8xf32>
    %53 = vector.extract_strided_slice %8 {offsets = [2, 0, 0], sizes = [8, 16, 4], strides = [1, 1, 1]} : vector<10x16x4xf32> to vector<8x16x4xf32>
    %54 = vector.shape_cast %53 : vector<8x16x4xf32> to vector<128x4xf32>
    %c7 = arith.constant 7 : index
    %c0_33 = arith.constant 0 : index
    %c0_34 = arith.constant 0 : index
    %55 = vector.load %arg5[%c7, %c0_33, %c0_34] : memref<9x4x8xf32, #tpu.memory_space<vmem>>, vector<1x4x8xf32>
    %56 = vector.shape_cast %55 : vector<1x4x8xf32> to vector<4x8xf32>
    %cst_35 = arith.constant dense<0.000000e+00> : vector<128x8xf32>
    %57 = tpu.matmul %54, %56, %cst_35 {dimension_numbers = #tpu.dot_dimension_numbers<[1], [0], [0], [1], [0, 0, 1, 1], [], []>} : vector<128x4xf32>, vector<4x8xf32>, vector<128x8xf32> -> vector<128x8xf32>
    %58 = arith.addf %52, %57 : vector<128x8xf32>
    %59 = vector.extract_strided_slice %9 {offsets = [2, 0, 0], sizes = [8, 16, 4], strides = [1, 1, 1]} : vector<10x16x4xf32> to vector<8x16x4xf32>
    %60 = vector.shape_cast %59 : vector<8x16x4xf32> to vector<128x4xf32>
    %c8 = arith.constant 8 : index
    %c0_36 = arith.constant 0 : index
    %c0_37 = arith.constant 0 : index
    %61 = vector.load %arg5[%c8, %c0_36, %c0_37] : memref<9x4x8xf32, #tpu.memory_space<vmem>>, vector<1x4x8xf32>
    %62 = vector.shape_cast %61 : vector<1x4x8xf32> to vector<4x8xf32>
    %cst_38 = arith.constant dense<0.000000e+00> : vector<128x8xf32>
    %63 = tpu.matmul %60, %62, %cst_38 {dimension_numbers = #tpu.dot_dimension_numbers<[1], [0], [0], [1], [0, 0, 1, 1], [], []>} : vector<128x4xf32>, vector<4x8xf32>, vector<128x8xf32> -> vector<128x8xf32>
    %64 = arith.addf %58, %63 : vector<128x8xf32>
    %c0_39 = arith.constant 0 : index
    %c0_40 = arith.constant 0 : index
    %65 = vector.load %arg6[%c0_39, %c0_40] : memref<1x8xf32, #tpu.memory_space<vmem>>, vector<1x8xf32>
    %66 = vector.broadcast %65 : vector<1x8xf32> to vector<128x8xf32>
    %67 = arith.addf %64, %66 : vector<128x8xf32>
    %68 = tpu.transpose %67, [1, 0] : vector<128x8xf32> -> vector<8x128xf32>
    %69 = vector.shape_cast %68 : vector<8x128xf32> to vector<1x8x128xf32>
    %c0_41 = arith.constant 0 : index
    %c0_42 = arith.constant 0 : index
    %c0_43 = arith.constant 0 : index
    %70 = vector.load %arg7[%c0_41, %c0_42, %c0_43] : memref<1x8x128xf32, #tpu.memory_space<vmem>>, vector<1x8x128xf32>
    tpu.vector_store %arg7[%c0_41, %c0_42, %c0_43], %69 {strides = array<i32>} : memref<1x8x128xf32, #tpu.memory_space<vmem>>, vector<1x8x128xf32>,
    return
  }
  func.func @transform_0(%arg0: i32, %arg1: i32) -> (i32, i32, i32, i32) {
    %c0_i32 = arith.constant 0 : i32
    %c0_i32_0 = arith.constant 0 : i32
    %c0_i32_1 = arith.constant 0 : i32
    return %arg0, %arg1, %c0_i32, %c0_i32_0 : i32, i32, i32, i32
  }
  func.func @transform_1(%arg0: i32, %arg1: i32) -> (i32, i32, i32, i32) {
    %c1_i32 = arith.constant 1 : i32
    %0 = arith.addi %arg1, %c1_i32 : i32
    %c8_i32 = arith.constant 8 : i32
    %1 = arith.muli %0, %c8_i32 : i32
    %c0_i32 = arith.constant 0 : i32
    %c0_i32_0 = arith.constant 0 : i32
    %c0_i32_1 = arith.constant 0 : i32
    return %arg0, %1, %c0_i32, %c0_i32_0 : i32, i32, i32, i32
  }
  func.func @transform_2(%arg0: i32, %arg1: i32) -> (i32, i32, i32, i32) {
    %c1_i32 = arith.constant 1 : i32
    %0 = arith.addi %arg1, %c1_i32 : i32
    %c8_i32 = arith.constant 8 : i32
    %1 = arith.muli %0, %c8_i32 : i32
    %c1_i32_0 = arith.constant 1 : i32
    %2 = arith.addi %1, %c1_i32_0 : i32
    %c0_i32 = arith.constant 0 : i32
    %c0_i32_1 = arith.constant 0 : i32
    %c0_i32_2 = arith.constant 0 : i32
    return %arg0, %2, %c0_i32, %c0_i32_1 : i32, i32, i32, i32
  }
  func.func @transform_3(%arg0: i32, %arg1: i32) -> (i32, i32, i32) {
    %c0_i32 = arith.constant 0 : i32
    %c0_i32_0 = arith.constant 0 : i32
    %c0_i32_1 = arith.constant 0 : i32
    %c0_i32_2 = arith.constant 0 : i32
    return %c0_i32, %c0_i32_0, %c0_i32_1 : i32, i32, i32
  }
  func.func @transform_4(%arg0: i32, %arg1: i32) -> (i32, i32) {
    %c0_i32 = arith.constant 0 : i32
    %c0_i32_0 = arith.constant 0 : i32
    %c0_i32_1 = arith.constant 0 : i32
    return %c0_i32, %c0_i32_0 : i32, i32
  }
  func.func @transform_5(%arg0: i32, %arg1: i32) -> (i32, i32, i32) {
    %c0_i32 = arith.constant 0 : i32
    %c0_i32_0 = arith.constant 0 : i32
    return %arg0, %c0_i32, %arg1 : i32, i32, i32
  }
}

</mosaic_0001>

<llo_original>
// kernel: tpu_custom_call.1
$region0: #{tpu_custom_call.1}
  #allocation0 [shape = 'u32[]', space=smem, size = 0x4, offset = 0x4, fixed_abs, tag = 'smem constant byte address 0x4 - core index']
  #allocation1 [shape = 'u32[144,128]{1,0:T(1,128)}', space=vmem, size = 0x12000, scoped, tag = 'internal scratch']
  %s0 = inlined_call_operand.vmem [shape: f32[2,18,18,4], index: 0, kind: input, shape index: {}]
  %s1 = inlined_call_operand.vmem [shape: f32[2,18,18,4], index: 1, kind: input, shape index: {}]
  %s2 = inlined_call_operand.vmem [shape: f32[2,18,18,4], index: 2, kind: input, shape index: {}]
  %s3 = inlined_call_operand.vmem [shape: f32[9,4,8], index: 3, kind: input, shape index: {}]
  %s4 = inlined_call_operand.vmem [shape: f32[1,8], index: 4, kind: input, shape index: {}]
  %s5 = inlined_call_operand.hbm [shape: f32[2,8,256], index: 5, kind: output, shape index: {}]
  %s6 = sld [smem:[#allocation0]]
  $region53: #{tpu_custom_call.1} parent=0
    _
  %s8 = ssub.s32 1, %s6
  %s9 = scalar_select 0, %s8, %s6
  $region1: #{tpu_custom_call.1} parent=0
    #allocation2 [shape = 'u8[8192]{0}', space=vmem, size = 0x2000, scoped, tag = 'output window, operand 0']
    #allocation3 [shape = 's32[2]{0}', space=sflag, size = 0x8, scoped, tag = 'scoped memory for tpu_custom_call.1']
    %10 = vsyncpa [#allocation3], 0
    %s11 = scalar_lea.sflag [#allocation3], 1
    %12 = vsyncpa %s11, 0
    loop: start=0, step=1, limit=6
    $region2: #{tpu_custom_call.1} parent=1 // loop_pre_header
      _
    $region3: #{tpu_custom_call.1} parent=1 // loop_header
      %s14 = sphi 0, %s18
      %p15 = scmp.ge.s32.totalorder %s14, 6
      %s21 = sphi 0, %s33
      %s22 = sphi 0, %s29
      %s23 = sphi 0, %s21
      %s24 = sphi 0, %s22
      %s25 = sphi 0, %s23
      %s26 = sphi 0, %s24
      %s38 = sphi 0, %s40
      %s41 = sphi 0, %s38
      %s42 = sphi 0, %s41
      %s58 = sphi 0, %s42
      %s70 = sphi 0, %s72
      %s73 = sphi 0, %s70
      %s74 = sphi 0, %s73
      %s90 = sphi 0, %s74
      %s104 = sphi 0, %s106
      %s107 = sphi 0, %s104
      %s108 = sphi 0, %s107
      %s124 = sphi 0, %s108
      %s128 = sphi 0, %s128
      %s130 = sphi 0, %s128
      %s131 = sphi 0, %s130
      %s145 = sphi 0, %s131
      %s149 = sphi 0, %s149
      %s151 = sphi 0, %s149
      %s152 = sphi 0, %s151
      %s166 = sphi 0, %s152
      %s174 = sphi 0, %s176
      %s177 = sphi 0, %s174
      %s178 = sphi 0, %s177
      %s194 = sphi 0, %s178
    $region4: #{tpu_custom_call.1} parent=1 // loop_header_branch
      %17 = sbr.rel (%p15) target = $region8
    $region5: #{tpu_custom_call.1} parent=1 // loop_body
      %s19 = ssub.s32 %s14, 1
      %s20 = ssub.s32 %s14, 2
      %s27 = sadd.s32 1, %s22
      %p28 = scmp.ge.s32.totalorder %s27, 2
      %s29 = scalar_select %p28, 0, %s27
      %s30 = sadd.s32 1, %s21
      %s31 = scalar_select %p28, %s30, %s21
      %p32 = scmp.ge.s32.totalorder %s31, 2
      %s33 = scalar_select %p32, 0, %s31
      %s34 = ssub.s32 %s21, %s33
      %s35 = ssub.s32 %s22, %s29
      %s36 = sor.u32 %s34, %s35
      %p37 = scmp.eq.s32.totalorder %s36, 0
      %s39 = sadd.s32 %s38, 1
      %s40 = scalar_select %p37, %s38, %s39
      %p43 = pneg %p37
      %p44 = scmp.eq.s32.totalorder %s14, 3
      %p45 = por %p43, %p44
      %p46 = scmp.ne.s32.totalorder %s38, %s41
      %p47 = scmp.eq.s32.totalorder %s14, 0
      %p48 = por %p46, %p47
      %p49 = scmp.ne.s32.totalorder %s38, %s41
      %p50 = scmp.eq.s32.totalorder %s19, 3
      %p51 = por %p49, %p50
      %p52 = scmp.ne.s32.totalorder %s41, %s42
      %p53 = scmp.eq.s32.totalorder %s19, 0
      %p54 = por %p52, %p53
      %p55 = scmp.ne.s32.totalorder %s41, %s42
      %p56 = scmp.eq.s32.totalorder %s20, 3
      %p57 = por %p55, %p56
      %p59 = scmp.ne.s32.totalorder %s42, %s58
      %p60 = scmp.eq.s32.totalorder %s20, 0
      %p61 = por %p59, %p60
      %s62 = sadd.s32 %s22, 1
      %s63 = smul.u32 %s62, 8
      %s64 = sadd.s32 %s29, 1
      %s65 = smul.u32 %s64, 8
      %s66 = ssub.s32 %s21, %s33
      %s67 = ssub.s32 %s63, %s65
      %s68 = sor.u32 %s66, %s67
      %p69 = scmp.eq.s32.totalorder %s68, 0
      %s71 = sadd.s32 %s70, 1
      %s72 = scalar_select %p69, %s70, %s71
      %p75 = pneg %p69
      %p76 = scmp.eq.s32.totalorder %s14, 3
      %p77 = por %p75, %p76
      %p78 = scmp.ne.s32.totalorder %s70, %s73
      %p79 = scmp.eq.s32.totalorder %s14, 0
      %p80 = por %p78, %p79
      %p81 = scmp.ne.s32.totalorder %s70, %s73
      %p82 = scmp.eq.s32.totalorder %s19, 3
      %p83 = por %p81, %p82
      %p84 = scmp.ne.s32.totalorder %s73, %s74
      %p85 = scmp.eq.s32.totalorder %s19, 0
      %p86 = por %p84, %p85
      %p87 = scmp.ne.s32.totalorder %s73, %s74
      %p88 = scmp.eq.s32.totalorder %s20, 3
      %p89 = por %p87, %p88
      %p91 = scmp.ne.s32.totalorder %s74, %s90
      %p92 = scmp.eq.s32.totalorder %s20, 0
      %p93 = por %p91, %p92
      %s94 = sadd.s32 %s22, 1
      %s95 = smul.u32 %s94, 8
      %s96 = sadd.s32 %s95, 1
      %s97 = sadd.s32 %s29, 1
      %s98 = smul.u32 %s97, 8
      %s99 = sadd.s32 %s98, 1
      %s100 = ssub.s32 %s21, %s33
      %s101 = ssub.s32 %s96, %s99
      %s102 = sor.u32 %s100, %s101
      %p103 = scmp.eq.s32.totalorder %s102, 0
      %s105 = sadd.s32 %s104, 1
      %s106 = scalar_select %p103, %s104, %s105
      %p109 = pneg %p103
      %p110 = scmp.eq.s32.totalorder %s14, 3
      %p111 = por %p109, %p110
      %p112 = scmp.ne.s32.totalorder %s104, %s107
      %p113 = scmp.eq.s32.totalorder %s14, 0
      %p114 = por %p112, %p113
      %p115 = scmp.ne.s32.totalorder %s104, %s107
      %p116 = scmp.eq.s32.totalorder %s19, 3
      %p117 = por %p115, %p116
      %p118 = scmp.ne.s32.totalorder %s107, %s108
      %p119 = scmp.eq.s32.totalorder %s19, 0
      %p120 = por %p118, %p119
      %p121 = scmp.ne.s32.totalorder %s107, %s108
      %p122 = scmp.eq.s32.totalorder %s20, 3
      %p123 = por %p121, %p122
      %p125 = scmp.ne.s32.totalorder %s108, %s124
      %p126 = scmp.eq.s32.totalorder %s20, 0
      %p127 = por %p125, %p126
      %s129 = sadd.s32 %s128, 1
      %p132 = scmp.eq.s32.totalorder %s14, 3
      %p133 = scmp.ne.s32.totalorder %s128, %s130
      %p134 = scmp.eq.s32.totalorder %s14, 0
      %p135 = por %p133, %p134
      %p136 = scmp.ne.s32.totalorder %s128, %s130
      %p137 = scmp.eq.s32.totalorder %s19, 3
      %p138 = por %p136, %p137
      %p139 = scmp.ne.s32.totalorder %s130, %s131
      %p140 = scmp.eq.s32.totalorder %s19, 0
      %p141 = por %p139, %p140
      %p142 = scmp.ne.s32.totalorder %s130, %s131
      %p143 = scmp.eq.s32.totalorder %s20, 3
      %p144 = por %p142, %p143
      %p146 = scmp.ne.s32.totalorder %s131, %s145
      %p147 = scmp.eq.s32.totalorder %s20, 0
      %p148 = por %p146, %p147
      %s150 = sadd.s32 %s149, 1
      %p153 = scmp.eq.s32.totalorder %s14, 3
      %p154 = scmp.ne.s32.totalorder %s149, %s151
      %p155 = scmp.eq.s32.totalorder %s14, 0
      %p156 = por %p154, %p155
      %p157 = scmp.ne.s32.totalorder %s149, %s151
      %p158 = scmp.eq.s32.totalorder %s19, 3
      %p159 = por %p157, %p158
      %p160 = scmp.ne.s32.totalorder %s151, %s152
      %p161 = scmp.eq.s32.totalorder %s19, 0
      %p162 = por %p160, %p161
      %p163 = scmp.ne.s32.totalorder %s151, %s152
      %p164 = scmp.eq.s32.totalorder %s20, 3
      %p165 = por %p163, %p164
      %p167 = scmp.ne.s32.totalorder %s152, %s166
      %p168 = scmp.eq.s32.totalorder %s20, 0
      %p169 = por %p167, %p168
      %s170 = ssub.s32 %s21, %s33
      %s171 = ssub.s32 %s22, %s29
      %s172 = sor.u32 %s170, %s171
      %p173 = scmp.eq.s32.totalorder %s172, 0
      %s175 = sadd.s32 %s174, 1
      %s176 = scalar_select %p173, %s174, %s175
      %p179 = pneg %p173
      %p180 = scmp.eq.s32.totalorder %s14, 3
      %p181 = por %p179, %p180
      %p182 = scmp.ne.s32.totalorder %s174, %s177
      %p183 = scmp.eq.s32.totalorder %s14, 0
      %p184 = por %p182, %p183
      %p185 = scmp.ne.s32.totalorder %s174, %s177
      %p186 = scmp.eq.s32.totalorder %s19, 3
      %p187 = por %p185, %p186
      %p188 = scmp.ne.s32.totalorder %s177, %s178
      %p189 = scmp.eq.s32.totalorder %s19, 0
      %p190 = por %p188, %p189
      %p191 = scmp.ne.s32.totalorder %s177, %s178
      %p192 = scmp.eq.s32.totalorder %s20, 3
      %p193 = por %p191, %p192
      %p195 = scmp.ne.s32.totalorder %s178, %s194
      %p196 = scmp.eq.s32.totalorder %s20, 0
      %p197 = por %p195, %p196
      %p198 = scmp.le.s32.totalorder 1, %s14
      %p199 = scmp.lt.s32.totalorder %s14, 5
      %p200 = pnand %p198, %p199
      %p201 = pneg %p200
      // Predicated region
      $region9: #{tpu_custom_call.1} parent=5 // pred_check
        _
      $region10: #{tpu_custom_call.1} parent=5 // pred_check_branch
        %203 = sbr.rel (%p200) target = $region12
      $region11: #{tpu_custom_call.1} parent=5 // pred_region
        %s204 = ssub.s32 %s14, 1
        // Predicated region
        $region13: #{tpu_custom_call.1} parent=11 // pred_check
          %p205 = pneg %p141
        $region14: #{tpu_custom_call.1} parent=11 // pred_check_branch
          %207 = sbr.rel (%p205) target = $region16
        $region15: #{tpu_custom_call.1} parent=11 // pred_region
          _
        $region16: #{tpu_custom_call.1} parent=11 // pred_fallthru
          _
        // Predicated region
        $region17: #{tpu_custom_call.1} parent=11 // pred_check
          %p208 = pneg %p162
        $region18: #{tpu_custom_call.1} parent=11 // pred_check_branch
          %210 = sbr.rel (%p208) target = $region20
        $region19: #{tpu_custom_call.1} parent=11 // pred_region
          _
        $region20: #{tpu_custom_call.1} parent=11 // pred_fallthru
          _
      $region12: #{tpu_custom_call.1} parent=5 // pred_fallthru
        _
      %p211 = scmp.lt.s32.totalorder %s14, 4
      // Predicated region
      $region21: #{tpu_custom_call.1} parent=5 // pred_check
        %p212 = pneg %p211
      $region22: #{tpu_custom_call.1} parent=5 // pred_check_branch
        %214 = sbr.rel (%p212) target = $region24
      $region23: #{tpu_custom_call.1} parent=5 // pred_region
        // Predicated region
        $region25: #{tpu_custom_call.1} parent=23 // pred_check
          %p215 = pneg %p48
        $region26: #{tpu_custom_call.1} parent=23 // pred_check_branch
          %217 = sbr.rel (%p215) target = $region28
        $region27: #{tpu_custom_call.1} parent=23 // pred_region
          %s218 = smul.u32 8, %s22
          %s219 = ssub.s32 18, %s218
          %p220 = scmp.lt.s32.totalorder %s219, 8
          %s221 = scalar_select %p220, %s219, 8
          %s222 = smul.u32 128, %s221
          %s223 = smul.u32 %s222, 3
          %p224 = scmp.lt.s32.totalorder %s21, 1
          %s225 = scalar_select %p224, %s21, 1
          %p226 = scmp.lt.s32.totalorder %s218, 17
          %s227 = scalar_select %p226, %s218, 17
          %s228 = smul.addr %s227, 3
          %s229 = smul.addr %s225, 54
          %s230 = sadd.s32 %s228, %s229
          %s231 = smul.addr %s230, 8
          %s232 = scalar_lea.vmem %s0, %s231
          %s233 = smul.u32 8, %s22
          %s234 = ssub.s32 18, %s233
          %p235 = scmp.lt.s32.totalorder %s234, 8
          %s236 = scalar_select %p235, %s234, 8
          %s237 = smul.u32 128, %s236
          %s238 = smul.u32 %s237, 3
        $region28: #{tpu_custom_call.1} parent=23 // pred_fallthru
          _
        // Predicated region
        $region29: #{tpu_custom_call.1} parent=23 // pred_check
          %p239 = pneg %p80
        $region30: #{tpu_custom_call.1} parent=23 // pred_check_branch
          %241 = sbr.rel (%p239) target = $region32
        $region31: #{tpu_custom_call.1} parent=23 // pred_region
          %s242 = sadd.s32 %s22, 1
          %s243 = smul.u32 %s242, 8
          %p244 = scmp.lt.s32.totalorder %s21, 1
          %s245 = scalar_select %p244, %s21, 1
          %p246 = scmp.lt.s32.totalorder %s243, 17
          %s247 = scalar_select %p246, %s243, 17
          %s248 = smul.addr %s247, 3
          %s249 = smul.addr %s245, 54
          %s250 = sadd.s32 %s248, %s249
          %s251 = smul.addr %s250, 8
          %s252 = scalar_lea.vmem %s1, %s251
          %s253 = sadd.s32 %s22, 1
          %s254 = smul.u32 %s253, 8
        $region32: #{tpu_custom_call.1} parent=23 // pred_fallthru
          _
        // Predicated region
        $region33: #{tpu_custom_call.1} parent=23 // pred_check
          %p255 = pneg %p114
        $region34: #{tpu_custom_call.1} parent=23 // pred_check_branch
          %257 = sbr.rel (%p255) target = $region36
        $region35: #{tpu_custom_call.1} parent=23 // pred_region
          %s258 = sadd.s32 %s22, 1
          %s259 = smul.u32 %s258, 8
          %s260 = sadd.s32 %s259, 1
          %p261 = scmp.lt.s32.totalorder %s21, 1
          %s262 = scalar_select %p261, %s21, 1
          %p263 = scmp.lt.s32.totalorder %s260, 17
          %s264 = scalar_select %p263, %s260, 17
          %s265 = smul.addr %s264, 3
          %s266 = smul.addr %s262, 54
          %s267 = sadd.s32 %s265, %s266
          %s268 = smul.addr %s267, 8
          %s269 = scalar_lea.vmem %s2, %s268
          %s270 = sadd.s32 %s22, 1
          %s271 = smul.u32 %s270, 8
          %s272 = sadd.s32 %s271, 1
        $region36: #{tpu_custom_call.1} parent=23 // pred_fallthru
          _
      $region24: #{tpu_custom_call.1} parent=5 // pred_fallthru
        _
      %p273 = scmp.le.s32.totalorder 1, %s14
      %p274 = scmp.lt.s32.totalorder %s14, 5
      %p275 = pnand %p273, %p274
      %p276 = pneg %p275
      // Predicated region
      $region37: #{tpu_custom_call.1} parent=5 // pred_check
        _
      $region38: #{tpu_custom_call.1} parent=5 // pred_check_branch
        %278 = sbr.rel (%p275) target = $region40
      $region39: #{tpu_custom_call.1} parent=5 // pred_region
        %s279 = ssub.s32 %s14, 1
        %s280 = smul.u32 8, %s24
        %s281 = ssub.s32 18, %s280
        %p282 = scmp.lt.s32.totalorder %s281, 8
        %s283 = scalar_select %p282, %s281, 8
        %s284 = smul.u32 128, %s283
        %s285 = smul.u32 %s284, 3
        %p286 = scmp.lt.s32.totalorder %s23, 1
        %s287 = scalar_select %p286, %s23, 1
        %p288 = scmp.lt.s32.totalorder %s280, 17
        %s289 = scalar_select %p288, %s280, 17
        %s290 = smul.addr %s289, 3
        %s291 = smul.addr %s287, 54
        %s292 = sadd.s32 %s290, %s291
        %s293 = smul.addr %s292, 8
        %s294 = scalar_lea.vmem %s0, %s293
        %p295 = pneg %p54
        %p296 = pneg %p51
        %s297 = sadd.s32 %s24, 1
        %s298 = smul.u32 %s297, 8
        %p299 = scmp.lt.s32.totalorder %s23, 1
        %s300 = scalar_select %p299, %s23, 1
        %p301 = scmp.lt.s32.totalorder %s298, 17
        %s302 = scalar_select %p301, %s298, 17
        %s303 = smul.addr %s302, 3
        %s304 = smul.addr %s300, 54
        %s305 = sadd.s32 %s303, %s304
        %s306 = smul.addr %s305, 8
        %s307 = scalar_lea.vmem %s1, %s306
        %p308 = pneg %p86
        %p309 = pneg %p83
        %s310 = sadd.s32 %s24, 1
        %s311 = smul.u32 %s310, 8
        %s312 = sadd.s32 %s311, 1
        %p313 = scmp.lt.s32.totalorder %s23, 1
        %s314 = scalar_select %p313, %s23, 1
        %p315 = scmp.lt.s32.totalorder %s312, 17
        %s316 = scalar_select %p315, %s312, 17
        %s317 = smul.addr %s316, 3
        %s318 = smul.addr %s314, 54
        %s319 = sadd.s32 %s317, %s318
        %s320 = smul.addr %s319, 8
        %s321 = scalar_lea.vmem %s2, %s320
        %p322 = pneg %p120
        %p323 = pneg %p117
        %p324 = pneg %p141
        %p325 = pneg %p138
        %p326 = pneg %p162
        %p327 = pneg %p159
        %p328 = pneg %p190
        %p329 = pneg %p187
        %s330 = sand.u32 %s177, 1
        %s331 = scalar_lea.sflag [#allocation3], %s330
        %s332 = sand.u32 %s177, 1
        %s333 = smul.addr %s332, 8
        %s334 = scalar_lea.vmem [#allocation2], %s333
        %s335 = smul.u32 8, %s24
        %s336 = ssub.s32 18, %s335
        %p337 = scmp.lt.s32.totalorder %s336, 8
        %s338 = scalar_select %p337, %s336, 8
        %s339 = smul.u32 128, %s338
        %s340 = smul.u32 %s339, 3
        %p341 = scmp.lt.s32.totalorder %s23, 1
        %s342 = scalar_select %p341, %s23, 1
        %p343 = scmp.lt.s32.totalorder %s335, 17
        %s344 = scalar_select %p343, %s335, 17
        %s345 = smul.addr %s344, 3
        %s346 = smul.addr %s342, 54
        %s347 = sadd.s32 %s345, %s346
        %s348 = smul.addr %s347, 8
        %s349 = scalar_lea.vmem %s0, %s348
        %s350 = smul.u32 8, %s24
        %s351 = ssub.s32 18, %s350
        %p352 = scmp.lt.s32.totalorder %s351, 8
        %s353 = scalar_select %p352, %s351, 8
        %s354 = smul.u32 128, %s353
        %s355 = smul.u32 %s354, 3
        %s356 = sadd.s32 %s24, 1
        %s357 = smul.u32 %s356, 8
        %p358 = scmp.lt.s32.totalorder %s23, 1
        %s359 = scalar_select %p358, %s23, 1
        %p360 = scmp.lt.s32.totalorder %s357, 17
        %s361 = scalar_select %p360, %s357, 17
        %s362 = smul.addr %s361, 3
        %s363 = smul.addr %s359, 54
        %s364 = sadd.s32 %s362, %s363
        %s365 = smul.addr %s364, 8
        %s366 = scalar_lea.vmem %s1, %s365
        %s367 = sadd.s32 %s24, 1
        %s368 = smul.u32 %s367, 8
        %s369 = sadd.s32 %s24, 1
        %s370 = smul.u32 %s369, 8
        %s371 = sadd.s32 %s370, 1
        %p372 = scmp.lt.s32.totalorder %s23, 1
        %s373 = scalar_select %p372, %s23, 1
        %p374 = scmp.lt.s32.totalorder %s371, 17
        %s375 = scalar_select %p374, %s371, 17
        %s376 = smul.addr %s375, 3
        %s377 = smul.addr %s373, 54
        %s378 = sadd.s32 %s376, %s377
        %s379 = smul.addr %s378, 8
        %s380 = scalar_lea.vmem %s2, %s379
        %s381 = sadd.s32 %s24, 1
        %s382 = smul.u32 %s381, 8
        %s383 = sadd.s32 %s382, 1
        %v384 = vld [vmem:[%s349] sm:$0xff]
        %v385 = vld [vmem:[%s349 + $0x8] sm:$0xff]
        %v386 = vld [vmem:[%s349 + $0x10] sm:$0x3]
        %v387 = vld [vmem:[%s349 + $0x18] sm:$0xff]
        %v388 = vld [vmem:[%s349 + $0x20] sm:$0xff]
        %v389 = vld [vmem:[%s349 + $0x28] sm:$0x3]
        %v390 = vld [vmem:[%s349 + $0x30] sm:$0xff]
        %v391 = vld [vmem:[%s349 + $0x38] sm:$0xff]
        %v392 = vld [vmem:[%s349 + $0x40] sm:$0x3]
        %v393 = vld [vmem:[%s349 + $0x48] sm:$0xff]
        %v394 = vld [vmem:[%s349 + $0x50] sm:$0xff]
        %v395 = vld [vmem:[%s349 + $0x58] sm:$0x3]
        %v396 = vld [vmem:[%s349 + $0x60] sm:$0xff]
        %v397 = vld [vmem:[%s349 + $0x68] sm:$0xff]
        %v398 = vld [vmem:[%s349 + $0x70] sm:$0x3]
        %v399 = vld [vmem:[%s349 + $0x78] sm:$0xff]
        %v400 = vld [vmem:[%s349 + $0x80] sm:$0xff]
        %v401 = vld [vmem:[%s349 + $0x88] sm:$0x3]
        %v402 = vld [vmem:[%s349 + $0x90] sm:$0xff]
        %v403 = vld [vmem:[%s349 + $0x98] sm:$0xff]
        %v404 = vld [vmem:[%s349 + $0xa0] sm:$0x3]
        %v405 = vld [vmem:[%s349 + $0xa8] sm:$0xff]
        %v406 = vld [vmem:[%s349 + $0xb0] sm:$0xff]
        %v407 = vld [vmem:[%s349 + $0xb8] sm:$0x3]
        %v408 = vld [vmem:[%s366] sm:$0xff]
        %v409 = vld [vmem:[%s366 + $0x8] sm:$0xff]
        %v410 = vld [vmem:[%s366 + $0x10] sm:$0x3]
        %v411 = vld [vmem:[%s380] sm:$0xff]
        %v412 = vld [vmem:[%s380 + $0x8] sm:$0xff]
        %v413 = vld [vmem:[%s380 + $0x10] sm:$0x3]
        %v414 = vld [vmem:[%s3] sm:$0xf]
        %vm439 = vcmask 1046528
        %v440 = vrot.slane %v384, 1
        %v441 = vrot.slane %v385, 1
        %v442 = vsel %vm439, %v440, %v441
        %v443 = vrot.slane %v386, 1
        %v444 = vsel %vm439, %v441, %v443
        %v445 = vrot.slane %v387, 1
        %v446 = vrot.slane %v388, 1
        %v447 = vsel %vm439, %v445, %v446
        %v448 = vrot.slane %v389, 1
        %v449 = vsel %vm439, %v446, %v448
        %v450 = vrot.slane %v390, 1
        %v451 = vrot.slane %v391, 1
        %v452 = vsel %vm439, %v450, %v451
        %v453 = vrot.slane %v392, 1
        %v454 = vsel %vm439, %v451, %v453
        %v455 = vrot.slane %v393, 1
        %v456 = vrot.slane %v394, 1
        %v457 = vsel %vm439, %v455, %v456
        %v458 = vrot.slane %v395, 1
        %v459 = vsel %vm439, %v456, %v458
        %v460 = vrot.slane %v396, 1
        %v461 = vrot.slane %v397, 1
        %v462 = vsel %vm439, %v460, %v461
        %v463 = vrot.slane %v398, 1
        %v464 = vsel %vm439, %v461, %v463
        %v465 = vrot.slane %v399, 1
        %v466 = vrot.slane %v400, 1
        %v467 = vsel %vm439, %v465, %v466
        %v468 = vrot.slane %v401, 1
        %v469 = vsel %vm439, %v466, %v468
        %v470 = vrot.slane %v402, 1
        %v471 = vrot.slane %v403, 1
        %v472 = vsel %vm439, %v470, %v471
        %v473 = vrot.slane %v404, 1
        %v474 = vsel %vm439, %v471, %v473
        %v475 = vrot.slane %v405, 1
        %v476 = vrot.slane %v406, 1
        %v477 = vsel %vm439, %v475, %v476
        %v478 = vrot.slane %v407, 1
        %v479 = vsel %vm439, %v476, %v478
        %s480 = scalar_lea.vmem %s3, 4
        %v481 = vld [vmem:[%s480] sm:$0xf]
        %vm482 = vcmask 31744
        %v483 = vsel %vm482, %v442, 0
        %v485 = vsel %vm482, %v444, 0
        %v487 = vsel %vm482, %v447, 0
        %v489 = vsel %vm482, %v449, 0
        %v491 = vsel %vm482, %v452, 0
        %v493 = vsel %vm482, %v454, 0
        %v495 = vsel %vm482, %v457, 0
        %v497 = vsel %vm482, %v459, 0
        %v499 = vsel %vm482, %v462, 0
        %v501 = vsel %vm482, %v464, 0
        %v503 = vsel %vm482, %v467, 0
        %v505 = vsel %vm482, %v469, 0
        %v507 = vsel %vm482, %v472, 0
        %v509 = vsel %vm482, %v474, 0
        %v511 = vsel %vm482, %v477, 0
        %v513 = vsel %vm482, %v479, 0
        %vm515 = vcmask 1043456
        %v517 = vsel %vm515, %v481, 0
        %519 = vmatprep.subr.mxu0 0.0
        %520 = vmatpush1.msra.mxu0 %v517
        %521 = vmatprep.subr.mxu0 0.0
        %522 = vmatpush1.msra.mxu0 0.0
        %523 = vmatprep.subr.mxu0 0.0
        %524 = vmatpush1.msra.mxu0 0.0
        %525 = vmatprep.subr.mxu0 0.0
        %526 = vmatpush1.msra.mxu0 0.0
        %527 = vmatprep.subr.mxu0 0.0
        %528 = vmatpush1.msra.mxu0 0.0
        %529 = vmatprep.subr.mxu0 0.0
        %530 = vmatpush1.msra.mxu0 0.0
        %531 = vmatprep.subr.mxu0 0.0
        %532 = vmatpush1.msra.mxu0 0.0
        %533 = vmatprep.subr.mxu0 0.0
        %534 = vmatpush1.msra.mxu0 0.0
        %535 = vmatprep.subr.mxu0 0.0
        %536 = vmatpush1.msra.mxu0 0.0
        %537 = vmatprep.subr.mxu0 0.0
        %538 = vmatpush1.msra.mxu0 0.0
        %539 = vmatprep.subr.mxu0 0.0
        %540 = vmatpush1.msra.mxu0 0.0
        %541 = vmatprep.subr.mxu0 0.0
        %542 = vmatpush1.msra.mxu0 0.0
        %543 = vmatprep.subr.mxu0 0.0
        %544 = vmatpush1.msra.mxu0 0.0
        %545 = vmatprep.subr.mxu0 0.0
        %546 = vmatpush1.msra.mxu0 0.0
        %547 = vmatprep.subr.mxu0 0.0
        %548 = vmatpush1.msra.mxu0 0.0
        %549 = vmatprep.subr.mxu0 0.0
        %550 = vmatpush1.msra.mxu0 0.0
        %551 = vmatprep.subr.mxu0 0.0
        %552 = vmatpush1.msra.mxu0 0.0
        %553 = vmatprep.subr.mxu0 0.0
        %554 = vmatpush1.msra.mxu0 0.0
        %555 = vmatprep.subr.mxu0 0.0
        %556 = vmatpush1.msra.mxu0 0.0
        %557 = vmatprep.subr.mxu0 0.0
        %558 = vmatpush1.msra.mxu0 0.0
        %559 = vmatprep.subr.mxu0 0.0
        %560 = vmatpush1.msra.mxu0 0.0
        %561 = vmatprep.subr.mxu0 0.0
        %562 = vmatpush1.msra.mxu0 0.0
        %563 = vmatprep.subr.mxu0 0.0
        %564 = vmatpush1.msra.mxu0 0.0
        %565 = vmatprep.subr.mxu0 0.0
        %566 = vmatpush1.msra.mxu0 0.0
        %567 = vmatprep.subr.mxu0 0.0
        %568 = vmatpush1.msra.mxu0 0.0
        %569 = vmatprep.subr.mxu0 0.0
        %570 = vmatpush1.msra.mxu0 0.0
        %571 = vmatprep.subr.mxu0 0.0
        %572 = vmatpush1.msra.mxu0 0.0
        %573 = vmatprep.subr.mxu0 0.0
        %574 = vmatpush1.msra.mxu0 0.0
        %575 = vmatprep.subr.mxu0 0.0
        %576 = vmatpush1.msra.mxu0 0.0
        %577 = vmatprep.subr.mxu0 0.0
        %578 = vmatpush1.msra.mxu0 0.0
        %579 = vmatprep.subr.mxu0 0.0
        %580 = vmatpush1.msra.mxu0 0.0
        %581 = vmatprep.subr.mxu0 0.0
        %582 = vmatpush1.msra.mxu0 0.0
        %583 = vmatprep.mubr.f32.mxu0 0.0
        %584 = vmatmul.mubr.f32.gmra.mrb[0].mxu0 %v483
        %v585 = vpop.f32.mrb[0].mxu0
        %v586 = vadd.f32 0.0, %v585
        %v587 = vpop.f32.mrb[0].mxu0
        %588 = vmatprep.mubr.f32.mxu0 0.0
        %589 = vmatmul.mubr.f32.gmra.mrb[0].mxu0 %v485
        %v590 = vpop.f32.mrb[0].mxu0
        %v591 = vadd.f32 0.0, %v590
        %v592 = vpop.f32.mrb[0].mxu0
        %593 = vmatprep.mubr.f32.mxu0 0.0
        %594 = vmatmul.mubr.f32.gmra.mrb[0].mxu0 %v487
        %v595 = vpop.f32.mrb[0].mxu0
        %v596 = vadd.f32 0.0, %v595
        %v597 = vpop.f32.mrb[0].mxu0
        %598 = vmatprep.mubr.f32.mxu0 0.0
        %599 = vmatmul.mubr.f32.gmra.mrb[0].mxu0 %v489
        %v600 = vpop.f32.mrb[0].mxu0
        %v601 = vadd.f32 0.0, %v600
        %v602 = vpop.f32.mrb[0].mxu0
        %603 = vmatprep.mubr.f32.mxu0 0.0
        %604 = vmatmul.mubr.f32.gmra.mrb[0].mxu0 %v491
        %v605 = vpop.f32.mrb[0].mxu0
        %v606 = vadd.f32 0.0, %v605
        %v607 = vpop.f32.mrb[0].mxu0
        %608 = vmatprep.mubr.f32.mxu0 0.0
        %609 = vmatmul.mubr.f32.gmra.mrb[0].mxu0 %v493
        %v610 = vpop.f32.mrb[0].mxu0
        %v611 = vadd.f32 0.0, %v610
        %v612 = vpop.f32.mrb[0].mxu0
        %613 = vmatprep.mubr.f32.mxu0 0.0
        %614 = vmatmul.mubr.f32.gmra.mrb[0].mxu0 %v495
        %v615 = vpop.f32.mrb[0].mxu0
        %v616 = vadd.f32 0.0, %v615
        %v617 = vpop.f32.mrb[0].mxu0
        %618 = vmatprep.mubr.f32.mxu0 0.0
        %619 = vmatmul.mubr.f32.gmra.mrb[0].mxu0 %v497
        %v620 = vpop.f32.mrb[0].mxu0
        %v621 = vadd.f32 0.0, %v620
        %v622 = vpop.f32.mrb[0].mxu0
        %623 = vmatprep.mubr.f32.mxu0 0.0
        %624 = vmatmul.mubr.f32.gmra.mrb[0].mxu0 %v499
        %v625 = vpop.f32.mrb[0].mxu0
        %v626 = vadd.f32 0.0, %v625
        %v627 = vpop.f32.mrb[0].mxu0
        %628 = vmatprep.mubr.f32.mxu0 0.0
        %629 = vmatmul.mubr.f32.gmra.mrb[0].mxu0 %v501
        %v630 = vpop.f32.mrb[0].mxu0
        %v631 = vadd.f32 0.0, %v630
        %v632 = vpop.f32.mrb[0].mxu0
        %633 = vmatprep.mubr.f32.mxu0 0.0
        %634 = vmatmul.mubr.f32.gmra.mrb[0].mxu0 %v503
        %v635 = vpop.f32.mrb[0].mxu0
        %v636 = vadd.f32 0.0, %v635
        %v637 = vpop.f32.mrb[0].mxu0
        %638 = vmatprep.mubr.f32.mxu0 0.0
        %639 = vmatmul.mubr.f32.gmra.mrb[0].mxu0 %v505
        %v640 = vpop.f32.mrb[0].mxu0
        %v641 = vadd.f32 0.0, %v640
        %v642 = vpop.f32.mrb[0].mxu0
        %643 = vmatprep.mubr.f32.mxu0 0.0
        %644 = vmatmul.mubr.f32.gmra.mrb[0].mxu0 %v507
        %v645 = vpop.f32.mrb[0].mxu0
        %v646 = vadd.f32 0.0, %v645
        %v647 = vpop.f32.mrb[0].mxu0
        %648 = vmatprep.mubr.f32.mxu0 0.0
        %649 = vmatmul.mubr.f32.gmra.mrb[0].mxu0 %v509
        %v650 = vpop.f32.mrb[0].mxu0
        %v651 = vadd.f32 0.0, %v650
        %v652 = vpop.f32.mrb[0].mxu0
        %653 = vmatprep.mubr.f32.mxu0 0.0
        %654 = vmatmul.mubr.f32.gmra.mrb[0].mxu0 %v511
        %v655 = vpop.f32.mrb[0].mxu0
        %v656 = vadd.f32 0.0, %v655
        %v657 = vpop.f32.mrb[0].mxu0
        %658 = vmatprep.mubr.f32.mxu0 0.0
        %659 = vmatmul.mubr.f32.gmra.mrb[0].mxu0 %v513
        %v660 = vpop.f32.mrb[0].mxu0
        %v661 = vadd.f32 0.0, %v660
        %v662 = vpop.f32.mrb[0].mxu0
        %663 = vdwg.mxu0
        %v664 = vsel %vm482, %v384, 0
        %v666 = vsel %vm482, %v385, 0
        %v668 = vsel %vm482, %v387, 0
        %v670 = vsel %vm482, %v388, 0
        %v672 = vsel %vm482, %v390, 0
        %v674 = vsel %vm482, %v391, 0
        %v676 = vsel %vm482, %v393, 0
        %v678 = vsel %vm482, %v394, 0
        %v680 = vsel %vm482, %v396, 0
        %v682 = vsel %vm482, %v397, 0
        %v684 = vsel %vm482, %v399, 0
        %v686 = vsel %vm482, %v400, 0
        %v688 = vsel %vm482, %v402, 0
        %v690 = vsel %vm482, %v403, 0
        %v692 = vsel %vm482, %v405, 0
        %v694 = vsel %vm482, %v406, 0
        %v697 = vsel %vm515, %v414, 0
        %699 = vmatprep.subr.mxu0 0.0
        %700 = vmatpush1.msra.mxu0 %v697
        %701 = vmatprep.subr.mxu0 0.0
        %702 = vmatpush1.msra.mxu0 0.0
        %703 = vmatprep.subr.mxu0 0.0
        %704 = vmatpush1.msra.mxu0 0.0
        %705 = vmatprep.subr.mxu0 0.0
        %706 = vmatpush1.msra.mxu0 0.0
        %707 = vmatprep.subr.mxu0 0.0
        %708 = vmatpush1.msra.mxu0 0.0
        %709 = vmatprep.subr.mxu0 0.0
        %710 = vmatpush1.msra.mxu0 0.0
        %711 = vmatprep.subr.mxu0 0.0
        %712 = vmatpush1.msra.mxu0 0.0
        %713 = vmatprep.subr.mxu0 0.0
        %714 = vmatpush1.msra.mxu0 0.0
        %715 = vmatprep.subr.mxu0 0.0
        %716 = vmatpush1.msra.mxu0 0.0
        %717 = vmatprep.subr.mxu0 0.0
        %718 = vmatpush1.msra.mxu0 0.0
        %719 = vmatprep.subr.mxu0 0.0
        %720 = vmatpush1.msra.mxu0 0.0
        %721 = vmatprep.subr.mxu0 0.0
        %722 = vmatpush1.msra.mxu0 0.0
        %723 = vmatprep.subr.mxu0 0.0
        %724 = vmatpush1.msra.mxu0 0.0
        %725 = vmatprep.subr.mxu0 0.0
        %726 = vmatpush1.msra.mxu0 0.0
        %727 = vmatprep.subr.mxu0 0.0
        %728 = vmatpush1.msra.mxu0 0.0
        %729 = vmatprep.subr.mxu0 0.0
        %730 = vmatpush1.msra.mxu0 0.0
        %731 = vmatprep.subr.mxu0 0.0
        %732 = vmatpush1.msra.mxu0 0.0
        %733 = vmatprep.subr.mxu0 0.0
        %734 = vmatpush1.msra.mxu0 0.0
        %735 = vmatprep.subr.mxu0 0.0
        %736 = vmatpush1.msra.mxu0 0.0
        %737 = vmatprep.subr.mxu0 0.0
        %738 = vmatpush1.msra.mxu0 0.0
        %739 = vmatprep.subr.mxu0 0.0
        %740 = vmatpush1.msra.mxu0 0.0
        %741 = vmatprep.subr.mxu0 0.0
        %742 = vmatpush1.msra.mxu0 0.0
        %743 = vmatprep.subr.mxu0 0.0
        %744 = vmatpush1.msra.mxu0 0.0
        %745 = vmatprep.subr.mxu0 0.0
        %746 = vmatpush1.msra.mxu0 0.0
        %747 = vmatprep.subr.mxu0 0.0
        %748 = vmatpush1.msra.mxu0 0.0
        %749 = vmatprep.subr.mxu0 0.0
        %750 = vmatpush1.msra.mxu0 0.0
        %751 = vmatprep.subr.mxu0 0.0
        %752 = vmatpush1.msra.mxu0 0.0
        %753 = vmatprep.subr.mxu0 0.0
        %754 = vmatpush1.msra.mxu0 0.0
        %755 = vmatprep.subr.mxu0 0.0
        %756 = vmatpush1.msra.mxu0 0.0
        %757 = vmatprep.subr.mxu0 0.0
        %758 = vmatpush1.msra.mxu0 0.0
        %759 = vmatprep.subr.mxu0 0.0
        %760 = vmatpush1.msra.mxu0 0.0
        %761 = vmatprep.subr.mxu0 0.0
        %762 = vmatpush1.msra.mxu0 0.0
        %763 = vmatprep.mubr.f32.mxu0 0.0
        %764 = vmatmul.mubr.f32.gmra.mrb[0].mxu0 %v664
        %v765 = vpop.f32.mrb[0].mxu0
        %v766 = vadd.f32 %v586, %v765
        %v767 = vpop.f32.mrb[0].mxu0
        %768 = vmatprep.mubr.f32.mxu0 0.0
        %769 = vmatmul.mubr.f32.gmra.mrb[0].mxu0 %v666
        %v770 = vpop.f32.mrb[0].mxu0
        %v771 = vadd.f32 %v591, %v770
        %v772 = vpop.f32.mrb[0].mxu0
        %773 = vmatprep.mubr.f32.mxu0 0.0
        %774 = vmatmul.mubr.f32.gmra.mrb[0].mxu0 %v668
        %v775 = vpop.f32.mrb[0].mxu0
        %v776 = vadd.f32 %v596, %v775
        %v777 = vpop.f32.mrb[0].mxu0
        %778 = vmatprep.mubr.f32.mxu0 0.0
        %779 = vmatmul.mubr.f32.gmra.mrb[0].mxu0 %v670
        %v780 = vpop.f32.mrb[0].mxu0
        %v781 = vadd.f32 %v601, %v780
        %v782 = vpop.f32.mrb[0].mxu0
        %783 = vmatprep.mubr.f32.mxu0 0.0
        %784 = vmatmul.mubr.f32.gmra.mrb[0].mxu0 %v672
        %v785 = vpop.f32.mrb[0].mxu0
        %v786 = vadd.f32 %v606, %v785
        %v787 = vpop.f32.mrb[0].mxu0
        %788 = vmatprep.mubr.f32.mxu0 0.0
        %789 = vmatmul.mubr.f32.gmra.mrb[0].mxu0 %v674
        %v790 = vpop.f32.mrb[0].mxu0
        %v791 = vadd.f32 %v611, %v790
        %v792 = vpop.f32.mrb[0].mxu0
        %793 = vmatprep.mubr.f32.mxu0 0.0
        %794 = vmatmul.mubr.f32.gmra.mrb[0].mxu0 %v676
        %v795 = vpop.f32.mrb[0].mxu0
        %v796 = vadd.f32 %v616, %v795
        %v797 = vpop.f32.mrb[0].mxu0
        %798 = vmatprep.mubr.f32.mxu0 0.0
        %799 = vmatmul.mubr.f32.gmra.mrb[0].mxu0 %v678
        %v800 = vpop.f32.mrb[0].mxu0
        %v801 = vadd.f32 %v621, %v800
        %v802 = vpop.f32.mrb[0].mxu0
        %803 = vmatprep.mubr.f32.mxu0 0.0
        %804 = vmatmul.mubr.f32.gmra.mrb[0].mxu0 %v680
        %v805 = vpop.f32.mrb[0].mxu0
        %v806 = vadd.f32 %v626, %v805
        %v807 = vpop.f32.mrb[0].mxu0
        %808 = vmatprep.mubr.f32.mxu0 0.0
        %809 = vmatmul.mubr.f32.gmra.mrb[0].mxu0 %v682
        %v810 = vpop.f32.mrb[0].mxu0
        %v811 = vadd.f32 %v631, %v810
        %v812 = vpop.f32.mrb[0].mxu0
        %813 = vmatprep.mubr.f32.mxu0 0.0
        %814 = vmatmul.mubr.f32.gmra.mrb[0].mxu0 %v684
        %v815 = vpop.f32.mrb[0].mxu0
        %v816 = vadd.f32 %v636, %v815
        %v817 = vpop.f32.mrb[0].mxu0
        %818 = vmatprep.mubr.f32.mxu0 0.0
        %819 = vmatmul.mubr.f32.gmra.mrb[0].mxu0 %v686
        %v820 = vpop.f32.mrb[0].mxu0
        %v821 = vadd.f32 %v641, %v820
        %v822 = vpop.f32.mrb[0].mxu0
        %823 = vmatprep.mubr.f32.mxu0 0.0
        %824 = vmatmul.mubr.f32.gmra.mrb[0].mxu0 %v688
        %v825 = vpop.f32.mrb[0].mxu0
        %v826 = vadd.f32 %v646, %v825
        %v827 = vpop.f32.mrb[0].mxu0
        %828 = vmatprep.mubr.f32.mxu0 0.0
        %829 = vmatmul.mubr.f32.gmra.mrb[0].mxu0 %v690
        %v830 = vpop.f32.mrb[0].mxu0
        %v831 = vadd.f32 %v651, %v830
        %v832 = vpop.f32.mrb[0].mxu0
        %833 = vmatprep.mubr.f32.mxu0 0.0
        %834 = vmatmul.mubr.f32.gmra.mrb[0].mxu0 %v692
        %v835 = vpop.f32.mrb[0].mxu0
        %v836 = vadd.f32 %v656, %v835
        %v837 = vpop.f32.mrb[0].mxu0
        %838 = vmatprep.mubr.f32.mxu0 0.0
        %839 = vmatmul.mubr.f32.gmra.mrb[0].mxu0 %v694
        %v840 = vpop.f32.mrb[0].mxu0
        %v841 = vadd.f32 %v661, %v840
        %v842 = vpop.f32.mrb[0].mxu0
        %843 = vdwg.mxu0
        %vm844 = vcmask 1045504
        %v845 = vrot.slane %v384, 2
        %v846 = vrot.slane %v385, 2
        %v847 = vsel %vm844, %v845, %v846
        %v848 = vrot.slane %v386, 2
        %v849 = vsel %vm844, %v846, %v848
        %v850 = vrot.slane %v387, 2
        %v851 = vrot.slane %v388, 2
        %v852 = vsel %vm844, %v850, %v851
        %v853 = vrot.slane %v389, 2
        %v854 = vsel %vm844, %v851, %v853
        %v855 = vrot.slane %v390, 2
        %v856 = vrot.slane %v391, 2
        %v857 = vsel %vm844, %v855, %v856
        %v858 = vrot.slane %v392, 2
        %v859 = vsel %vm844, %v856, %v858
        %v860 = vrot.slane %v393, 2
        %v861 = vrot.slane %v394, 2
        %v862 = vsel %vm844, %v860, %v861
        %v863 = vrot.slane %v395, 2
        %v864 = vsel %vm844, %v861, %v863
        %v865 = vrot.slane %v396, 2
        %v866 = vrot.slane %v397, 2
        %v867 = vsel %vm844, %v865, %v866
        %v868 = vrot.slane %v398, 2
        %v869 = vsel %vm844, %v866, %v868
        %v870 = vrot.slane %v399, 2
        %v871 = vrot.slane %v400, 2
        %v872 = vsel %vm844, %v870, %v871
        %v873 = vrot.slane %v401, 2
        %v874 = vsel %vm844, %v871, %v873
        %v875 = vrot.slane %v402, 2
        %v876 = vrot.slane %v403, 2
        %v877 = vsel %vm844, %v875, %v876
        %v878 = vrot.slane %v404, 2
        %v879 = vsel %vm844, %v876, %v878
        %v880 = vrot.slane %v405, 2
        %v881 = vrot.slane %v406, 2
        %v882 = vsel %vm844, %v880, %v881
        %v883 = vrot.slane %v407, 2
        %v884 = vsel %vm844, %v881, %v883
        %s885 = scalar_lea.vmem %s3, 8
        %v886 = vld [vmem:[%s885] sm:$0xf]
        %v887 = vsel %vm482, %v847, 0
        %v889 = vsel %vm482, %v849, 0
        %v891 = vsel %vm482, %v852, 0
        %v893 = vsel %vm482, %v854, 0
        %v895 = vsel %vm482, %v857, 0
        %v897 = vsel %vm482, %v859, 0
        %v899 = vsel %vm482, %v862, 0
        %v901 = vsel %vm482, %v864, 0
        %v903 = vsel %vm482, %v867, 0
        %v905 = vsel %vm482, %v869, 0
        %v907 = vsel %vm482, %v872, 0
        %v909 = vsel %vm482, %v874, 0
        %v911 = vsel %vm482, %v877, 0
        %v913 = vsel %vm482, %v879, 0
        %v915 = vsel %vm482, %v882, 0
        %v917 = vsel %vm482, %v884, 0
        %v920 = vsel %vm515, %v886, 0
        %922 = vmatprep.subr.mxu0 0.0
        %923 = vmatpush1.msra.mxu0 %v920
        %924 = vmatprep.subr.mxu0 0.0
        %925 = vmatpush1.msra.mxu0 0.0
        %926 = vmatprep.subr.mxu0 0.0
        %927 = vmatpush1.msra.mxu0 0.0
        %928 = vmatprep.subr.mxu0 0.0
        %929 = vmatpush1.msra.mxu0 0.0
        %930 = vmatprep.subr.mxu0 0.0
        %931 = vmatpush1.msra.mxu0 0.0
        %932 = vmatprep.subr.mxu0 0.0
        %933 = vmatpush1.msra.mxu0 0.0
        %934 = vmatprep.subr.mxu0 0.0
        %935 = vmatpush1.msra.mxu0 0.0
        %936 = vmatprep.subr.mxu0 0.0
        %937 = vmatpush1.msra.mxu0 0.0
        %938 = vmatprep.subr.mxu0 0.0
        %939 = vmatpush1.msra.mxu0 0.0
        %940 = vmatprep.subr.mxu0 0.0
        %941 = vmatpush1.msra.mxu0 0.0
        %942 = vmatprep.subr.mxu0 0.0
        %943 = vmatpush1.msra.mxu0 0.0
        %944 = vmatprep.subr.mxu0 0.0
        %945 = vmatpush1.msra.mxu0 0.0
        %946 = vmatprep.subr.mxu0 0.0
        %947 = vmatpush1.msra.mxu0 0.0
        %948 = vmatprep.subr.mxu0 0.0
        %949 = vmatpush1.msra.mxu0 0.0
        %950 = vmatprep.subr.mxu0 0.0
        %951 = vmatpush1.msra.mxu0 0.0
        %952 = vmatprep.subr.mxu0 0.0
        %953 = vmatpush1.msra.mxu0 0.0
        %954 = vmatprep.subr.mxu0 0.0
        %955 = vmatpush1.msra.mxu0 0.0
        %956 = vmatprep.subr.mxu0 0.0
        %957 = vmatpush1.msra.mxu0 0.0
        %958 = vmatprep.subr.mxu0 0.0
        %959 = vmatpush1.msra.mxu0 0.0
        %960 = vmatprep.subr.mxu0 0.0
        %961 = vmatpush1.msra.mxu0 0.0
        %962 = vmatprep.subr.mxu0 0.0
        %963 = vmatpush1.msra.mxu0 0.0
        %964 = vmatprep.subr.mxu0 0.0
        %965 = vmatpush1.msra.mxu0 0.0
        %966 = vmatprep.subr.mxu0 0.0
        %967 = vmatpush1.msra.mxu0 0.0
        %968 = vmatprep.subr.mxu0 0.0
        %969 = vmatpush1.msra.mxu0 0.0
        %970 = vmatprep.subr.mxu0 0.0
        %971 = vmatpush1.msra.mxu0 0.0
        %972 = vmatprep.subr.mxu0 0.0
        %973 = vmatpush1.msra.mxu0 0.0
        %974 = vmatprep.subr.mxu0 0.0
        %975 = vmatpush1.msra.mxu0 0.0
        %976 = vmatprep.subr.mxu0 0.0
        %977 = vmatpush1.msra.mxu0 0.0
        %978 = vmatprep.subr.mxu0 0.0
        %979 = vmatpush1.msra.mxu0 0.0
        %980 = vmatprep.subr.mxu0 0.0
        %981 = vmatpush1.msra.mxu0 0.0
        %982 = vmatprep.subr.mxu0 0.0
        %983 = vmatpush1.msra.mxu0 0.0
        %984 = vmatprep.subr.mxu0 0.0
        %985 = vmatpush1.msra.mxu0 0.0
        %986 = vmatprep.mubr.f32.mxu0 0.0
        %987 = vmatmul.mubr.f32.gmra.mrb[0].mxu0 %v887
        %v988 = vpop.f32.mrb[0].mxu0
        %v989 = vadd.f32 0.0, %v988
        %v990 = vpop.f32.mrb[0].mxu0
        %991 = vmatprep.mubr.f32.mxu0 0.0
        %992 = vmatmul.mubr.f32.gmra.mrb[0].mxu0 %v889
        %v993 = vpop.f32.mrb[0].mxu0
        %v994 = vadd.f32 0.0, %v993
        %v995 = vpop.f32.mrb[0].mxu0
        %996 = vmatprep.mubr.f32.mxu0 0.0
        %997 = vmatmul.mubr.f32.gmra.mrb[0].mxu0 %v891
        %v998 = vpop.f32.mrb[0].mxu0
        %v999 = vadd.f32 0.0, %v998
        %v1000 = vpop.f32.mrb[0].mxu0
        %1001 = vmatprep.mubr.f32.mxu0 0.0
        %1002 = vmatmul.mubr.f32.gmra.mrb[0].mxu0 %v893
        %v1003 = vpop.f32.mrb[0].mxu0
        %v1004 = vadd.f32 0.0, %v1003
        %v1005 = vpop.f32.mrb[0].mxu0
        %1006 = vmatprep.mubr.f32.mxu0 0.0
        %1007 = vmatmul.mubr.f32.gmra.mrb[0].mxu0 %v895
        %v1008 = vpop.f32.mrb[0].mxu0
        %v1009 = vadd.f32 0.0, %v1008
        %v1010 = vpop.f32.mrb[0].mxu0
        %1011 = vmatprep.mubr.f32.mxu0 0.0
        %1012 = vmatmul.mubr.f32.gmra.mrb[0].mxu0 %v897
        %v1013 = vpop.f32.mrb[0].mxu0
        %v1014 = vadd.f32 0.0, %v1013
        %v1015 = vpop.f32.mrb[0].mxu0
        %1016 = vmatprep.mubr.f32.mxu0 0.0
        %1017 = vmatmul.mubr.f32.gmra.mrb[0].mxu0 %v899
        %v1018 = vpop.f32.mrb[0].mxu0
        %v1019 = vadd.f32 0.0, %v1018
        %v1020 = vpop.f32.mrb[0].mxu0
        %1021 = vmatprep.mubr.f32.mxu0 0.0
        %1022 = vmatmul.mubr.f32.gmra.mrb[0].mxu0 %v901
        %v1023 = vpop.f32.mrb[0].mxu0
        %v1024 = vadd.f32 0.0, %v1023
        %v1025 = vpop.f32.mrb[0].mxu0
        %1026 = vmatprep.mubr.f32.mxu0 0.0
        %1027 = vmatmul.mubr.f32.gmra.mrb[0].mxu0 %v903
        %v1028 = vpop.f32.mrb[0].mxu0
        %v1029 = vadd.f32 0.0, %v1028
        %v1030 = vpop.f32.mrb[0].mxu0
        %1031 = vmatprep.mubr.f32.mxu0 0.0
        %1032 = vmatmul.mubr.f32.gmra.mrb[0].mxu0 %v905
        %v1033 = vpop.f32.mrb[0].mxu0
        %v1034 = vadd.f32 0.0, %v1033
        %v1035 = vpop.f32.mrb[0].mxu0
        %1036 = vmatprep.mubr.f32.mxu0 0.0
        %1037 = vmatmul.mubr.f32.gmra.mrb[0].mxu0 %v907
        %v1038 = vpop.f32.mrb[0].mxu0
        %v1039 = vadd.f32 0.0, %v1038
        %v1040 = vpop.f32.mrb[0].mxu0
        %1041 = vmatprep.mubr.f32.mxu0 0.0
        %1042 = vmatmul.mubr.f32.gmra.mrb[0].mxu0 %v909
        %v1043 = vpop.f32.mrb[0].mxu0
        %v1044 = vadd.f32 0.0, %v1043
        %v1045 = vpop.f32.mrb[0].mxu0
        %1046 = vmatprep.mubr.f32.mxu0 0.0
        %1047 = vmatmul.mubr.f32.gmra.mrb[0].mxu0 %v911
        %v1048 = vpop.f32.mrb[0].mxu0
        %v1049 = vadd.f32 0.0, %v1048
        %v1050 = vpop.f32.mrb[0].mxu0
        %1051 = vmatprep.mubr.f32.mxu0 0.0
        %1052 = vmatmul.mubr.f32.gmra.mrb[0].mxu0 %v913
        %v1053 = vpop.f32.mrb[0].mxu0
        %v1054 = vadd.f32 0.0, %v1053
        %v1055 = vpop.f32.mrb[0].mxu0
        %1056 = vmatprep.mubr.f32.mxu0 0.0
        %1057 = vmatmul.mubr.f32.gmra.mrb[0].mxu0 %v915
        %v1058 = vpop.f32.mrb[0].mxu0
        %v1059 = vadd.f32 0.0, %v1058
        %v1060 = vpop.f32.mrb[0].mxu0
        %1061 = vmatprep.mubr.f32.mxu0 0.0
        %1062 = vmatmul.mubr.f32.gmra.mrb[0].mxu0 %v917
        %v1063 = vpop.f32.mrb[0].mxu0
        %v1064 = vadd.f32 0.0, %v1063
        %v1065 = vpop.f32.mrb[0].mxu0
        %1066 = vdwg.mxu0
        %v1067 = vadd.f32 %v766, %v989
        %v1068 = vadd.f32 %v771, %v994
        %v1069 = vadd.f32 %v776, %v999
        %v1070 = vadd.f32 %v781, %v1004
        %v1071 = vadd.f32 %v786, %v1009
        %v1072 = vadd.f32 %v791, %v1014
        %v1073 = vadd.f32 %v796, %v1019
        %v1074 = vadd.f32 %v801, %v1024
        %v1075 = vadd.f32 %v806, %v1029
        %v1076 = vadd.f32 %v811, %v1034
        %v1077 = vadd.f32 %v816, %v1039
        %v1078 = vadd.f32 %v821, %v1044
        %v1079 = vadd.f32 %v826, %v1049
        %v1080 = vadd.f32 %v831, %v1054
        %v1081 = vadd.f32 %v836, %v1059
        %v1082 = vadd.f32 %v841, %v1064
        %s1083 = scalar_lea.vmem %s3, 12
        %v1084 = vld [vmem:[%s1083] sm:$0xf]
        %v1086 = vsel %vm482, %v408, 0
        %v1089 = vsel %vm482, %v409, 0
        %v1092 = vsel %vm515, %v1084, 0
        %1094 = vmatprep.subr.mxu0 0.0
        %1095 = vmatpush1.msra.mxu0 %v1092
        %1096 = vmatprep.subr.mxu0 0.0
        %1097 = vmatpush1.msra.mxu0 0.0
        %1098 = vmatprep.subr.mxu0 0.0
        %1099 = vmatpush1.msra.mxu0 0.0
        %1100 = vmatprep.subr.mxu0 0.0
        %1101 = vmatpush1.msra.mxu0 0.0
        %1102 = vmatprep.subr.mxu0 0.0
        %1103 = vmatpush1.msra.mxu0 0.0
        %1104 = vmatprep.subr.mxu0 0.0
        %1105 = vmatpush1.msra.mxu0 0.0
        %1106 = vmatprep.subr.mxu0 0.0
        %1107 = vmatpush1.msra.mxu0 0.0
        %1108 = vmatprep.subr.mxu0 0.0
        %1109 = vmatpush1.msra.mxu0 0.0
        %1110 = vmatprep.subr.mxu0 0.0
        %1111 = vmatpush1.msra.mxu0 0.0
        %1112 = vmatprep.subr.mxu0 0.0
        %1113 = vmatpush1.msra.mxu0 0.0
        %1114 = vmatprep.subr.mxu0 0.0
        %1115 = vmatpush1.msra.mxu0 0.0
        %1116 = vmatprep.subr.mxu0 0.0
        %1117 = vmatpush1.msra.mxu0 0.0
        %1118 = vmatprep.subr.mxu0 0.0
        %1119 = vmatpush1.msra.mxu0 0.0
        %1120 = vmatprep.subr.mxu0 0.0
        %1121 = vmatpush1.msra.mxu0 0.0
        %1122 = vmatprep.subr.mxu0 0.0
        %1123 = vmatpush1.msra.mxu0 0.0
        %1124 = vmatprep.subr.mxu0 0.0
        %1125 = vmatpush1.msra.mxu0 0.0
        %1126 = vmatprep.subr.mxu0 0.0
        %1127 = vmatpush1.msra.mxu0 0.0
        %1128 = vmatprep.subr.mxu0 0.0
        %1129 = vmatpush1.msra.mxu0 0.0
        %1130 = vmatprep.subr.mxu0 0.0
        %1131 = vmatpush1.msra.mxu0 0.0
        %1132 = vmatprep.subr.mxu0 0.0
        %1133 = vmatpush1.msra.mxu0 0.0
        %1134 = vmatprep.subr.mxu0 0.0
        %1135 = vmatpush1.msra.mxu0 0.0
        %1136 = vmatprep.subr.mxu0 0.0
        %1137 = vmatpush1.msra.mxu0 0.0
        %1138 = vmatprep.subr.mxu0 0.0
        %1139 = vmatpush1.msra.mxu0 0.0
        %1140 = vmatprep.subr.mxu0 0.0
        %1141 = vmatpush1.msra.mxu0 0.0
        %1142 = vmatprep.subr.mxu0 0.0
        %1143 = vmatpush1.msra.mxu0 0.0
        %1144 = vmatprep.subr.mxu0 0.0
        %1145 = vmatpush1.msra.mxu0 0.0
        %1146 = vmatprep.subr.mxu0 0.0
        %1147 = vmatpush1.msra.mxu0 0.0
        %1148 = vmatprep.subr.mxu0 0.0
        %1149 = vmatpush1.msra.mxu0 0.0
        %1150 = vmatprep.subr.mxu0 0.0
        %1151 = vmatpush1.msra.mxu0 0.0
        %1152 = vmatprep.subr.mxu0 0.0
        %1153 = vmatpush1.msra.mxu0 0.0
        %1154 = vmatprep.subr.mxu0 0.0
        %1155 = vmatpush1.msra.mxu0 0.0
        %1156 = vmatprep.subr.mxu0 0.0
        %1157 = vmatpush1.msra.mxu0 0.0
        %1158 = vmatprep.mubr.f32.mxu0 0.0
        %1159 = vmatmul.mubr.f32.gmra.mrb[0].mxu0 %v668
        %v1160 = vpop.f32.mrb[0].mxu0
        %v1161 = vadd.f32 0.0, %v1160
        %v1162 = vpop.f32.mrb[0].mxu0
        %1163 = vmatprep.mubr.f32.mxu0 0.0
        %1164 = vmatmul.mubr.f32.gmra.mrb[0].mxu0 %v670
        %v1165 = vpop.f32.mrb[0].mxu0
        %v1166 = vadd.f32 0.0, %v1165
        %v1167 = vpop.f32.mrb[0].mxu0
        %1168 = vmatprep.mubr.f32.mxu0 0.0
        %1169 = vmatmul.mubr.f32.gmra.mrb[0].mxu0 %v672
        %v1170 = vpop.f32.mrb[0].mxu0
        %v1171 = vadd.f32 0.0, %v1170
        %v1172 = vpop.f32.mrb[0].mxu0
        %1173 = vmatprep.mubr.f32.mxu0 0.0
        %1174 = vmatmul.mubr.f32.gmra.mrb[0].mxu0 %v674
        %v1175 = vpop.f32.mrb[0].mxu0
        %v1176 = vadd.f32 0.0, %v1175
        %v1177 = vpop.f32.mrb[0].mxu0
        %1178 = vmatprep.mubr.f32.mxu0 0.0
        %1179 = vmatmul.mubr.f32.gmra.mrb[0].mxu0 %v676
        %v1180 = vpop.f32.mrb[0].mxu0
        %v1181 = vadd.f32 0.0, %v1180
        %v1182 = vpop.f32.mrb[0].mxu0
        %1183 = vmatprep.mubr.f32.mxu0 0.0
        %1184 = vmatmul.mubr.f32.gmra.mrb[0].mxu0 %v678
        %v1185 = vpop.f32.mrb[0].mxu0
        %v1186 = vadd.f32 0.0, %v1185
        %v1187 = vpop.f32.mrb[0].mxu0
        %1188 = vmatprep.mubr.f32.mxu0 0.0
        %1189 = vmatmul.mubr.f32.gmra.mrb[0].mxu0 %v680
        %v1190 = vpop.f32.mrb[0].mxu0
        %v1191 = vadd.f32 0.0, %v1190
        %v1192 = vpop.f32.mrb[0].mxu0
        %1193 = vmatprep.mubr.f32.mxu0 0.0
        %1194 = vmatmul.mubr.f32.gmra.mrb[0].mxu0 %v682
        %v1195 = vpop.f32.mrb[0].mxu0
        %v1196 = vadd.f32 0.0, %v1195
        %v1197 = vpop.f32.mrb[0].mxu0
        %1198 = vmatprep.mubr.f32.mxu0 0.0
        %1199 = vmatmul.mubr.f32.gmra.mrb[0].mxu0 %v684
        %v1200 = vpop.f32.mrb[0].mxu0
        %v1201 = vadd.f32 0.0, %v1200
        %v1202 = vpop.f32.mrb[0].mxu0
        %1203 = vmatprep.mubr.f32.mxu0 0.0
        %1204 = vmatmul.mubr.f32.gmra.mrb[0].mxu0 %v686
        %v1205 = vpop.f32.mrb[0].mxu0
        %v1206 = vadd.f32 0.0, %v1205
        %v1207 = vpop.f32.mrb[0].mxu0
        %1208 = vmatprep.mubr.f32.mxu0 0.0
        %1209 = vmatmul.mubr.f32.gmra.mrb[0].mxu0 %v688
        %v1210 = vpop.f32.mrb[0].mxu0
        %v1211 = vadd.f32 0.0, %v1210
        %v1212 = vpop.f32.mrb[0].mxu0
        %1213 = vmatprep.mubr.f32.mxu0 0.0
        %1214 = vmatmul.mubr.f32.gmra.mrb[0].mxu0 %v690
        %v1215 = vpop.f32.mrb[0].mxu0
        %v1216 = vadd.f32 0.0, %v1215
        %v1217 = vpop.f32.mrb[0].mxu0
        %1218 = vmatprep.mubr.f32.mxu0 0.0
        %1219 = vmatmul.mubr.f32.gmra.mrb[0].mxu0 %v692
        %v1220 = vpop.f32.mrb[0].mxu0
        %v1221 = vadd.f32 0.0, %v1220
        %v1222 = vpop.f32.mrb[0].mxu0
        %1223 = vmatprep.mubr.f32.mxu0 0.0
        %1224 = vmatmul.mubr.f32.gmra.mrb[0].mxu0 %v694
        %v1225 = vpop.f32.mrb[0].mxu0
        %v1226 = vadd.f32 0.0, %v1225
        %v1227 = vpop.f32.mrb[0].mxu0
        %1228 = vmatprep.mubr.f32.mxu0 0.0
        %1229 = vmatmul.mubr.f32.gmra.mrb[0].mxu0 %v1086
        %v1230 = vpop.f32.mrb[0].mxu0
        %v1231 = vadd.f32 0.0, %v1230
        %v1232 = vpop.f32.mrb[0].mxu0
        %1233 = vmatprep.mubr.f32.mxu0 0.0
        %1234 = vmatmul.mubr.f32.gmra.mrb[0].mxu0 %v1089
        %v1235 = vpop.f32.mrb[0].mxu0
        %v1236 = vadd.f32 0.0, %v1235
        %v1237 = vpop.f32.mrb[0].mxu0
        %1238 = vdwg.mxu0
        %v1239 = vadd.f32 %v1067, %v1161
        %v1240 = vadd.f32 %v1068, %v1166
        %v1241 = vadd.f32 %v1069, %v1171
        %v1242 = vadd.f32 %v1070, %v1176
        %v1243 = vadd.f32 %v1071, %v1181
        %v1244 = vadd.f32 %v1072, %v1186
        %v1245 = vadd.f32 %v1073, %v1191
        %v1246 = vadd.f32 %v1074, %v1196
        %v1247 = vadd.f32 %v1075, %v1201
        %v1248 = vadd.f32 %v1076, %v1206
        %v1249 = vadd.f32 %v1077, %v1211
        %v1250 = vadd.f32 %v1078, %v1216
        %v1251 = vadd.f32 %v1079, %v1221
        %v1252 = vadd.f32 %v1080, %v1226
        %v1253 = vadd.f32 %v1081, %v1231
        %v1254 = vadd.f32 %v1082, %v1236
        %v1256 = vrot.slane %v408, 1
        %v1257 = vrot.slane %v409, 1
        %v1258 = vsel %vm439, %v1256, %v1257
        %v1259 = vrot.slane %v410, 1
        %v1260 = vsel %vm439, %v1257, %v1259
        %s1261 = scalar_lea.vmem %s3, 16
        %v1262 = vld [vmem:[%s1261] sm:$0xf]
        %v1263 = vsel %vm482, %v1258, 0
        %v1265 = vsel %vm482, %v1260, 0
        %v1268 = vsel %vm515, %v1262, 0
        %1270 = vmatprep.subr.mxu0 0.0
        %1271 = vmatpush1.msra.mxu0 %v1268
        %1272 = vmatprep.subr.mxu0 0.0
        %1273 = vmatpush1.msra.mxu0 0.0
        %1274 = vmatprep.subr.mxu0 0.0
        %1275 = vmatpush1.msra.mxu0 0.0
        %1276 = vmatprep.subr.mxu0 0.0
        %1277 = vmatpush1.msra.mxu0 0.0
        %1278 = vmatprep.subr.mxu0 0.0
        %1279 = vmatpush1.msra.mxu0 0.0
        %1280 = vmatprep.subr.mxu0 0.0
        %1281 = vmatpush1.msra.mxu0 0.0
        %1282 = vmatprep.subr.mxu0 0.0
        %1283 = vmatpush1.msra.mxu0 0.0
        %1284 = vmatprep.subr.mxu0 0.0
        %1285 = vmatpush1.msra.mxu0 0.0
        %1286 = vmatprep.subr.mxu0 0.0
        %1287 = vmatpush1.msra.mxu0 0.0
        %1288 = vmatprep.subr.mxu0 0.0
        %1289 = vmatpush1.msra.mxu0 0.0
        %1290 = vmatprep.subr.mxu0 0.0
        %1291 = vmatpush1.msra.mxu0 0.0
        %1292 = vmatprep.subr.mxu0 0.0
        %1293 = vmatpush1.msra.mxu0 0.0
        %1294 = vmatprep.subr.mxu0 0.0
        %1295 = vmatpush1.msra.mxu0 0.0
        %1296 = vmatprep.subr.mxu0 0.0
        %1297 = vmatpush1.msra.mxu0 0.0
        %1298 = vmatprep.subr.mxu0 0.0
        %1299 = vmatpush1.msra.mxu0 0.0
        %1300 = vmatprep.subr.mxu0 0.0
        %1301 = vmatpush1.msra.mxu0 0.0
        %1302 = vmatprep.subr.mxu0 0.0
        %1303 = vmatpush1.msra.mxu0 0.0
        %1304 = vmatprep.subr.mxu0 0.0
        %1305 = vmatpush1.msra.mxu0 0.0
        %1306 = vmatprep.subr.mxu0 0.0
        %1307 = vmatpush1.msra.mxu0 0.0
        %1308 = vmatprep.subr.mxu0 0.0
        %1309 = vmatpush1.msra.mxu0 0.0
        %1310 = vmatprep.subr.mxu0 0.0
        %1311 = vmatpush1.msra.mxu0 0.0
        %1312 = vmatprep.subr.mxu0 0.0
        %1313 = vmatpush1.msra.mxu0 0.0
        %1314 = vmatprep.subr.mxu0 0.0
        %1315 = vmatpush1.msra.mxu0 0.0
        %1316 = vmatprep.subr.mxu0 0.0
        %1317 = vmatpush1.msra.mxu0 0.0
        %1318 = vmatprep.subr.mxu0 0.0
        %1319 = vmatpush1.msra.mxu0 0.0
        %1320 = vmatprep.subr.mxu0 0.0
        %1321 = vmatpush1.msra.mxu0 0.0
        %1322 = vmatprep.subr.mxu0 0.0
        %1323 = vmatpush1.msra.mxu0 0.0
        %1324 = vmatprep.subr.mxu0 0.0
        %1325 = vmatpush1.msra.mxu0 0.0
        %1326 = vmatprep.subr.mxu0 0.0
        %1327 = vmatpush1.msra.mxu0 0.0
        %1328 = vmatprep.subr.mxu0 0.0
        %1329 = vmatpush1.msra.mxu0 0.0
        %1330 = vmatprep.subr.mxu0 0.0
        %1331 = vmatpush1.msra.mxu0 0.0
        %1332 = vmatprep.subr.mxu0 0.0
        %1333 = vmatpush1.msra.mxu0 0.0
        %1334 = vmatprep.mubr.f32.mxu0 0.0
        %1335 = vmatmul.mubr.f32.gmra.mrb[0].mxu0 %v487
        %v1336 = vpop.f32.mrb[0].mxu0
        %v1337 = vadd.f32 0.0, %v1336
        %v1338 = vpop.f32.mrb[0].mxu0
        %1339 = vmatprep.mubr.f32.mxu0 0.0
        %1340 = vmatmul.mubr.f32.gmra.mrb[0].mxu0 %v489
        %v1341 = vpop.f32.mrb[0].mxu0
        %v1342 = vadd.f32 0.0, %v1341
        %v1343 = vpop.f32.mrb[0].mxu0
        %1344 = vmatprep.mubr.f32.mxu0 0.0
        %1345 = vmatmul.mubr.f32.gmra.mrb[0].mxu0 %v491
        %v1346 = vpop.f32.mrb[0].mxu0
        %v1347 = vadd.f32 0.0, %v1346
        %v1348 = vpop.f32.mrb[0].mxu0
        %1349 = vmatprep.mubr.f32.mxu0 0.0
        %1350 = vmatmul.mubr.f32.gmra.mrb[0].mxu0 %v493
        %v1351 = vpop.f32.mrb[0].mxu0
        %v1352 = vadd.f32 0.0, %v1351
        %v1353 = vpop.f32.mrb[0].mxu0
        %1354 = vmatprep.mubr.f32.mxu0 0.0
        %1355 = vmatmul.mubr.f32.gmra.mrb[0].mxu0 %v495
        %v1356 = vpop.f32.mrb[0].mxu0
        %v1357 = vadd.f32 0.0, %v1356
        %v1358 = vpop.f32.mrb[0].mxu0
        %1359 = vmatprep.mubr.f32.mxu0 0.0
        %1360 = vmatmul.mubr.f32.gmra.mrb[0].mxu0 %v497
        %v1361 = vpop.f32.mrb[0].mxu0
        %v1362 = vadd.f32 0.0, %v1361
        %v1363 = vpop.f32.mrb[0].mxu0
        %1364 = vmatprep.mubr.f32.mxu0 0.0
        %1365 = vmatmul.mubr.f32.gmra.mrb[0].mxu0 %v499
        %v1366 = vpop.f32.mrb[0].mxu0
        %v1367 = vadd.f32 0.0, %v1366
        %v1368 = vpop.f32.mrb[0].mxu0
        %1369 = vmatprep.mubr.f32.mxu0 0.0
        %1370 = vmatmul.mubr.f32.gmra.mrb[0].mxu0 %v501
        %v1371 = vpop.f32.mrb[0].mxu0
        %v1372 = vadd.f32 0.0, %v1371
        %v1373 = vpop.f32.mrb[0].mxu0
        %1374 = vmatprep.mubr.f32.mxu0 0.0
        %1375 = vmatmul.mubr.f32.gmra.mrb[0].mxu0 %v503
        %v1376 = vpop.f32.mrb[0].mxu0
        %v1377 = vadd.f32 0.0, %v1376
        %v1378 = vpop.f32.mrb[0].mxu0
        %1379 = vmatprep.mubr.f32.mxu0 0.0
        %1380 = vmatmul.mubr.f32.gmra.mrb[0].mxu0 %v505
        %v1381 = vpop.f32.mrb[0].mxu0
        %v1382 = vadd.f32 0.0, %v1381
        %v1383 = vpop.f32.mrb[0].mxu0
        %1384 = vmatprep.mubr.f32.mxu0 0.0
        %1385 = vmatmul.mubr.f32.gmra.mrb[0].mxu0 %v507
        %v1386 = vpop.f32.mrb[0].mxu0
        %v1387 = vadd.f32 0.0, %v1386
        %v1388 = vpop.f32.mrb[0].mxu0
        %1389 = vmatprep.mubr.f32.mxu0 0.0
        %1390 = vmatmul.mubr.f32.gmra.mrb[0].mxu0 %v509
        %v1391 = vpop.f32.mrb[0].mxu0
        %v1392 = vadd.f32 0.0, %v1391
        %v1393 = vpop.f32.mrb[0].mxu0
        %1394 = vmatprep.mubr.f32.mxu0 0.0
        %1395 = vmatmul.mubr.f32.gmra.mrb[0].mxu0 %v511
        %v1396 = vpop.f32.mrb[0].mxu0
        %v1397 = vadd.f32 0.0, %v1396
        %v1398 = vpop.f32.mrb[0].mxu0
        %1399 = vmatprep.mubr.f32.mxu0 0.0
        %1400 = vmatmul.mubr.f32.gmra.mrb[0].mxu0 %v513
        %v1401 = vpop.f32.mrb[0].mxu0
        %v1402 = vadd.f32 0.0, %v1401
        %v1403 = vpop.f32.mrb[0].mxu0
        %1404 = vmatprep.mubr.f32.mxu0 0.0
        %1405 = vmatmul.mubr.f32.gmra.mrb[0].mxu0 %v1263
        %v1406 = vpop.f32.mrb[0].mxu0
        %v1407 = vadd.f32 0.0, %v1406
        %v1408 = vpop.f32.mrb[0].mxu0
        %1409 = vmatprep.mubr.f32.mxu0 0.0
        %1410 = vmatmul.mubr.f32.gmra.mrb[0].mxu0 %v1265
        %v1411 = vpop.f32.mrb[0].mxu0
        %v1412 = vadd.f32 0.0, %v1411
        %v1413 = vpop.f32.mrb[0].mxu0
        %1414 = vdwg.mxu0
        %v1415 = vadd.f32 %v1239, %v1337
        %v1416 = vadd.f32 %v1240, %v1342
        %v1417 = vadd.f32 %v1241, %v1347
        %v1418 = vadd.f32 %v1242, %v1352
        %v1419 = vadd.f32 %v1243, %v1357
        %v1420 = vadd.f32 %v1244, %v1362
        %v1421 = vadd.f32 %v1245, %v1367
        %v1422 = vadd.f32 %v1246, %v1372
        %v1423 = vadd.f32 %v1247, %v1377
        %v1424 = vadd.f32 %v1248, %v1382
        %v1425 = vadd.f32 %v1249, %v1387
        %v1426 = vadd.f32 %v1250, %v1392
        %v1427 = vadd.f32 %v1251, %v1397
        %v1428 = vadd.f32 %v1252, %v1402
        %v1429 = vadd.f32 %v1253, %v1407
        %v1430 = vadd.f32 %v1254, %v1412
        %v1431 = vrot.slane %v408, 2
        %v1432 = vrot.slane %v409, 2
        %v1433 = vsel %vm844, %v1431, %v1432
        %v1434 = vrot.slane %v410, 2
        %v1435 = vsel %vm844, %v1432, %v1434
        %s1436 = scalar_lea.vmem %s3, 20
        %v1437 = vld [vmem:[%s1436] sm:$0xf]
        %v1438 = vsel %vm482, %v1433, 0
        %v1440 = vsel %vm482, %v1435, 0
        %v1443 = vsel %vm515, %v1437, 0
        %1445 = vmatprep.subr.mxu0 0.0
        %1446 = vmatpush1.msra.mxu0 %v1443
        %1447 = vmatprep.subr.mxu0 0.0
        %1448 = vmatpush1.msra.mxu0 0.0
        %1449 = vmatprep.subr.mxu0 0.0
        %1450 = vmatpush1.msra.mxu0 0.0
        %1451 = vmatprep.subr.mxu0 0.0
        %1452 = vmatpush1.msra.mxu0 0.0
        %1453 = vmatprep.subr.mxu0 0.0
        %1454 = vmatpush1.msra.mxu0 0.0
        %1455 = vmatprep.subr.mxu0 0.0
        %1456 = vmatpush1.msra.mxu0 0.0
        %1457 = vmatprep.subr.mxu0 0.0
        %1458 = vmatpush1.msra.mxu0 0.0
        %1459 = vmatprep.subr.mxu0 0.0
        %1460 = vmatpush1.msra.mxu0 0.0
        %1461 = vmatprep.subr.mxu0 0.0
        %1462 = vmatpush1.msra.mxu0 0.0
        %1463 = vmatprep.subr.mxu0 0.0
        %1464 = vmatpush1.msra.mxu0 0.0
        %1465 = vmatprep.subr.mxu0 0.0
        %1466 = vmatpush1.msra.mxu0 0.0
        %1467 = vmatprep.subr.mxu0 0.0
        %1468 = vmatpush1.msra.mxu0 0.0
        %1469 = vmatprep.subr.mxu0 0.0
        %1470 = vmatpush1.msra.mxu0 0.0
        %1471 = vmatprep.subr.mxu0 0.0
        %1472 = vmatpush1.msra.mxu0 0.0
        %1473 = vmatprep.subr.mxu0 0.0
        %1474 = vmatpush1.msra.mxu0 0.0
        %1475 = vmatprep.subr.mxu0 0.0
        %1476 = vmatpush1.msra.mxu0 0.0
        %1477 = vmatprep.subr.mxu0 0.0
        %1478 = vmatpush1.msra.mxu0 0.0
        %1479 = vmatprep.subr.mxu0 0.0
        %1480 = vmatpush1.msra.mxu0 0.0
        %1481 = vmatprep.subr.mxu0 0.0
        %1482 = vmatpush1.msra.mxu0 0.0
        %1483 = vmatprep.subr.mxu0 0.0
        %1484 = vmatpush1.msra.mxu0 0.0
        %1485 = vmatprep.subr.mxu0 0.0
        %1486 = vmatpush1.msra.mxu0 0.0
        %1487 = vmatprep.subr.mxu0 0.0
        %1488 = vmatpush1.msra.mxu0 0.0
        %1489 = vmatprep.subr.mxu0 0.0
        %1490 = vmatpush1.msra.mxu0 0.0
        %1491 = vmatprep.subr.mxu0 0.0
        %1492 = vmatpush1.msra.mxu0 0.0
        %1493 = vmatprep.subr.mxu0 0.0
        %1494 = vmatpush1.msra.mxu0 0.0
        %1495 = vmatprep.subr.mxu0 0.0
        %1496 = vmatpush1.msra.mxu0 0.0
        %1497 = vmatprep.subr.mxu0 0.0
        %1498 = vmatpush1.msra.mxu0 0.0
        %1499 = vmatprep.subr.mxu0 0.0
        %1500 = vmatpush1.msra.mxu0 0.0
        %1501 = vmatprep.subr.mxu0 0.0
        %1502 = vmatpush1.msra.mxu0 0.0
        %1503 = vmatprep.subr.mxu0 0.0
        %1504 = vmatpush1.msra.mxu0 0.0
        %1505 = vmatprep.subr.mxu0 0.0
        %1506 = vmatpush1.msra.mxu0 0.0
        %1507 = vmatprep.subr.mxu0 0.0
        %1508 = vmatpush1.msra.mxu0 0.0
        %1509 = vmatprep.mubr.f32.mxu0 0.0
        %1510 = vmatmul.mubr.f32.gmra.mrb[0].mxu0 %v891
        %v1511 = vpop.f32.mrb[0].mxu0
        %v1512 = vadd.f32 0.0, %v1511
        %v1513 = vpop.f32.mrb[0].mxu0
        %1514 = vmatprep.mubr.f32.mxu0 0.0
        %1515 = vmatmul.mubr.f32.gmra.mrb[0].mxu0 %v893
        %v1516 = vpop.f32.mrb[0].mxu0
        %v1517 = vadd.f32 0.0, %v1516
        %v1518 = vpop.f32.mrb[0].mxu0
        %1519 = vmatprep.mubr.f32.mxu0 0.0
        %1520 = vmatmul.mubr.f32.gmra.mrb[0].mxu0 %v895
        %v1521 = vpop.f32.mrb[0].mxu0
        %v1522 = vadd.f32 0.0, %v1521
        %v1523 = vpop.f32.mrb[0].mxu0
        %1524 = vmatprep.mubr.f32.mxu0 0.0
        %1525 = vmatmul.mubr.f32.gmra.mrb[0].mxu0 %v897
        %v1526 = vpop.f32.mrb[0].mxu0
        %v1527 = vadd.f32 0.0, %v1526
        %v1528 = vpop.f32.mrb[0].mxu0
        %1529 = vmatprep.mubr.f32.mxu0 0.0
        %1530 = vmatmul.mubr.f32.gmra.mrb[0].mxu0 %v899
        %v1531 = vpop.f32.mrb[0].mxu0
        %v1532 = vadd.f32 0.0, %v1531
        %v1533 = vpop.f32.mrb[0].mxu0
        %1534 = vmatprep.mubr.f32.mxu0 0.0
        %1535 = vmatmul.mubr.f32.gmra.mrb[0].mxu0 %v901
        %v1536 = vpop.f32.mrb[0].mxu0
        %v1537 = vadd.f32 0.0, %v1536
        %v1538 = vpop.f32.mrb[0].mxu0
        %1539 = vmatprep.mubr.f32.mxu0 0.0
        %1540 = vmatmul.mubr.f32.gmra.mrb[0].mxu0 %v903
        %v1541 = vpop.f32.mrb[0].mxu0
        %v1542 = vadd.f32 0.0, %v1541
        %v1543 = vpop.f32.mrb[0].mxu0
        %1544 = vmatprep.mubr.f32.mxu0 0.0
        %1545 = vmatmul.mubr.f32.gmra.mrb[0].mxu0 %v905
        %v1546 = vpop.f32.mrb[0].mxu0
        %v1547 = vadd.f32 0.0, %v1546
        %v1548 = vpop.f32.mrb[0].mxu0
        %1549 = vmatprep.mubr.f32.mxu0 0.0
        %1550 = vmatmul.mubr.f32.gmra.mrb[0].mxu0 %v907
        %v1551 = vpop.f32.mrb[0].mxu0
        %v1552 = vadd.f32 0.0, %v1551
        %v1553 = vpop.f32.mrb[0].mxu0
        %1554 = vmatprep.mubr.f32.mxu0 0.0
        %1555 = vmatmul.mubr.f32.gmra.mrb[0].mxu0 %v909
        %v1556 = vpop.f32.mrb[0].mxu0
        %v1557 = vadd.f32 0.0, %v1556
        %v1558 = vpop.f32.mrb[0].mxu0
        %1559 = vmatprep.mubr.f32.mxu0 0.0
        %1560 = vmatmul.mubr.f32.gmra.mrb[0].mxu0 %v911
        %v1561 = vpop.f32.mrb[0].mxu0
        %v1562 = vadd.f32 0.0, %v1561
        %v1563 = vpop.f32.mrb[0].mxu0
        %1564 = vmatprep.mubr.f32.mxu0 0.0
        %1565 = vmatmul.mubr.f32.gmra.mrb[0].mxu0 %v913
        %v1566 = vpop.f32.mrb[0].mxu0
        %v1567 = vadd.f32 0.0, %v1566
        %v1568 = vpop.f32.mrb[0].mxu0
        %1569 = vmatprep.mubr.f32.mxu0 0.0
        %1570 = vmatmul.mubr.f32.gmra.mrb[0].mxu0 %v915
        %v1571 = vpop.f32.mrb[0].mxu0
        %v1572 = vadd.f32 0.0, %v1571
        %v1573 = vpop.f32.mrb[0].mxu0
        %1574 = vmatprep.mubr.f32.mxu0 0.0
        %1575 = vmatmul.mubr.f32.gmra.mrb[0].mxu0 %v917
        %v1576 = vpop.f32.mrb[0].mxu0
        %v1577 = vadd.f32 0.0, %v1576
        %v1578 = vpop.f32.mrb[0].mxu0
        %1579 = vmatprep.mubr.f32.mxu0 0.0
        %1580 = vmatmul.mubr.f32.gmra.mrb[0].mxu0 %v1438
        %v1581 = vpop.f32.mrb[0].mxu0
        %v1582 = vadd.f32 0.0, %v1581
        %v1583 = vpop.f32.mrb[0].mxu0
        %1584 = vmatprep.mubr.f32.mxu0 0.0
        %1585 = vmatmul.mubr.f32.gmra.mrb[0].mxu0 %v1440
        %v1586 = vpop.f32.mrb[0].mxu0
        %v1587 = vadd.f32 0.0, %v1586
        %v1588 = vpop.f32.mrb[0].mxu0
        %1589 = vdwg.mxu0
        %v1590 = vadd.f32 %v1415, %v1512
        %v1591 = vadd.f32 %v1416, %v1517
        %v1592 = vadd.f32 %v1417, %v1522
        %v1593 = vadd.f32 %v1418, %v1527
        %v1594 = vadd.f32 %v1419, %v1532
        %v1595 = vadd.f32 %v1420, %v1537
        %v1596 = vadd.f32 %v1421, %v1542
        %v1597 = vadd.f32 %v1422, %v1547
        %v1598 = vadd.f32 %v1423, %v1552
        %v1599 = vadd.f32 %v1424, %v1557
        %v1600 = vadd.f32 %v1425, %v1562
        %v1601 = vadd.f32 %v1426, %v1567
        %v1602 = vadd.f32 %v1427, %v1572
        %v1603 = vadd.f32 %v1428, %v1577
        %v1604 = vadd.f32 %v1429, %v1582
        %v1605 = vadd.f32 %v1430, %v1587
        %s1606 = scalar_lea.vmem %s3, 24
        %v1607 = vld [vmem:[%s1606] sm:$0xf]
        %v1609 = vsel %vm482, %v411, 0
        %v1612 = vsel %vm482, %v412, 0
        %v1615 = vsel %vm515, %v1607, 0
        %1617 = vmatprep.subr.mxu0 0.0
        %1618 = vmatpush1.msra.mxu0 %v1615
        %1619 = vmatprep.subr.mxu0 0.0
        %1620 = vmatpush1.msra.mxu0 0.0
        %1621 = vmatprep.subr.mxu0 0.0
        %1622 = vmatpush1.msra.mxu0 0.0
        %1623 = vmatprep.subr.mxu0 0.0
        %1624 = vmatpush1.msra.mxu0 0.0
        %1625 = vmatprep.subr.mxu0 0.0
        %1626 = vmatpush1.msra.mxu0 0.0
        %1627 = vmatprep.subr.mxu0 0.0
        %1628 = vmatpush1.msra.mxu0 0.0
        %1629 = vmatprep.subr.mxu0 0.0
        %1630 = vmatpush1.msra.mxu0 0.0
        %1631 = vmatprep.subr.mxu0 0.0
        %1632 = vmatpush1.msra.mxu0 0.0
        %1633 = vmatprep.subr.mxu0 0.0
        %1634 = vmatpush1.msra.mxu0 0.0
        %1635 = vmatprep.subr.mxu0 0.0
        %1636 = vmatpush1.msra.mxu0 0.0
        %1637 = vmatprep.subr.mxu0 0.0
        %1638 = vmatpush1.msra.mxu0 0.0
        %1639 = vmatprep.subr.mxu0 0.0
        %1640 = vmatpush1.msra.mxu0 0.0
        %1641 = vmatprep.subr.mxu0 0.0
        %1642 = vmatpush1.msra.mxu0 0.0
        %1643 = vmatprep.subr.mxu0 0.0
        %1644 = vmatpush1.msra.mxu0 0.0
        %1645 = vmatprep.subr.mxu0 0.0
        %1646 = vmatpush1.msra.mxu0 0.0
        %1647 = vmatprep.subr.mxu0 0.0
        %1648 = vmatpush1.msra.mxu0 0.0
        %1649 = vmatprep.subr.mxu0 0.0
        %1650 = vmatpush1.msra.mxu0 0.0
        %1651 = vmatprep.subr.mxu0 0.0
        %1652 = vmatpush1.msra.mxu0 0.0
        %1653 = vmatprep.subr.mxu0 0.0
        %1654 = vmatpush1.msra.mxu0 0.0
        %1655 = vmatprep.subr.mxu0 0.0
        %1656 = vmatpush1.msra.mxu0 0.0
        %1657 = vmatprep.subr.mxu0 0.0
        %1658 = vmatpush1.msra.mxu0 0.0
        %1659 = vmatprep.subr.mxu0 0.0
        %1660 = vmatpush1.msra.mxu0 0.0
        %1661 = vmatprep.subr.mxu0 0.0
        %1662 = vmatpush1.msra.mxu0 0.0
        %1663 = vmatprep.subr.mxu0 0.0
        %1664 = vmatpush1.msra.mxu0 0.0
        %1665 = vmatprep.subr.mxu0 0.0
        %1666 = vmatpush1.msra.mxu0 0.0
        %1667 = vmatprep.subr.mxu0 0.0
        %1668 = vmatpush1.msra.mxu0 0.0
        %1669 = vmatprep.subr.mxu0 0.0
        %1670 = vmatpush1.msra.mxu0 0.0
        %1671 = vmatprep.subr.mxu0 0.0
        %1672 = vmatpush1.msra.mxu0 0.0
        %1673 = vmatprep.subr.mxu0 0.0
        %1674 = vmatpush1.msra.mxu0 0.0
        %1675 = vmatprep.subr.mxu0 0.0
        %1676 = vmatpush1.msra.mxu0 0.0
        %1677 = vmatprep.subr.mxu0 0.0
        %1678 = vmatpush1.msra.mxu0 0.0
        %1679 = vmatprep.subr.mxu0 0.0
        %1680 = vmatpush1.msra.mxu0 0.0
        %1681 = vmatprep.mubr.f32.mxu0 0.0
        %1682 = vmatmul.mubr.f32.gmra.mrb[0].mxu0 %v672
        %v1683 = vpop.f32.mrb[0].mxu0
        %v1684 = vadd.f32 0.0, %v1683
        %v1685 = vpop.f32.mrb[0].mxu0
        %1686 = vmatprep.mubr.f32.mxu0 0.0
        %1687 = vmatmul.mubr.f32.gmra.mrb[0].mxu0 %v674
        %v1688 = vpop.f32.mrb[0].mxu0
        %v1689 = vadd.f32 0.0, %v1688
        %v1690 = vpop.f32.mrb[0].mxu0
        %1691 = vmatprep.mubr.f32.mxu0 0.0
        %1692 = vmatmul.mubr.f32.gmra.mrb[0].mxu0 %v676
        %v1693 = vpop.f32.mrb[0].mxu0
        %v1694 = vadd.f32 0.0, %v1693
        %v1695 = vpop.f32.mrb[0].mxu0
        %1696 = vmatprep.mubr.f32.mxu0 0.0
        %1697 = vmatmul.mubr.f32.gmra.mrb[0].mxu0 %v678
        %v1698 = vpop.f32.mrb[0].mxu0
        %v1699 = vadd.f32 0.0, %v1698
        %v1700 = vpop.f32.mrb[0].mxu0
        %1701 = vmatprep.mubr.f32.mxu0 0.0
        %1702 = vmatmul.mubr.f32.gmra.mrb[0].mxu0 %v680
        %v1703 = vpop.f32.mrb[0].mxu0
        %v1704 = vadd.f32 0.0, %v1703
        %v1705 = vpop.f32.mrb[0].mxu0
        %1706 = vmatprep.mubr.f32.mxu0 0.0
        %1707 = vmatmul.mubr.f32.gmra.mrb[0].mxu0 %v682
        %v1708 = vpop.f32.mrb[0].mxu0
        %v1709 = vadd.f32 0.0, %v1708
        %v1710 = vpop.f32.mrb[0].mxu0
        %1711 = vmatprep.mubr.f32.mxu0 0.0
        %1712 = vmatmul.mubr.f32.gmra.mrb[0].mxu0 %v684
        %v1713 = vpop.f32.mrb[0].mxu0
        %v1714 = vadd.f32 0.0, %v1713
        %v1715 = vpop.f32.mrb[0].mxu0
        %1716 = vmatprep.mubr.f32.mxu0 0.0
        %1717 = vmatmul.mubr.f32.gmra.mrb[0].mxu0 %v686
        %v1718 = vpop.f32.mrb[0].mxu0
        %v1719 = vadd.f32 0.0, %v1718
        %v1720 = vpop.f32.mrb[0].mxu0
        %1721 = vmatprep.mubr.f32.mxu0 0.0
        %1722 = vmatmul.mubr.f32.gmra.mrb[0].mxu0 %v688
        %v1723 = vpop.f32.mrb[0].mxu0
        %v1724 = vadd.f32 0.0, %v1723
        %v1725 = vpop.f32.mrb[0].mxu0
        %1726 = vmatprep.mubr.f32.mxu0 0.0
        %1727 = vmatmul.mubr.f32.gmra.mrb[0].mxu0 %v690
        %v1728 = vpop.f32.mrb[0].mxu0
        %v1729 = vadd.f32 0.0, %v1728
        %v1730 = vpop.f32.mrb[0].mxu0
        %1731 = vmatprep.mubr.f32.mxu0 0.0
        %1732 = vmatmul.mubr.f32.gmra.mrb[0].mxu0 %v692
        %v1733 = vpop.f32.mrb[0].mxu0
        %v1734 = vadd.f32 0.0, %v1733
        %v1735 = vpop.f32.mrb[0].mxu0
        %1736 = vmatprep.mubr.f32.mxu0 0.0
        %1737 = vmatmul.mubr.f32.gmra.mrb[0].mxu0 %v694
        %v1738 = vpop.f32.mrb[0].mxu0
        %v1739 = vadd.f32 0.0, %v1738
        %v1740 = vpop.f32.mrb[0].mxu0
        %1741 = vmatprep.mubr.f32.mxu0 0.0
        %1742 = vmatmul.mubr.f32.gmra.mrb[0].mxu0 %v1086
        %v1743 = vpop.f32.mrb[0].mxu0
        %v1744 = vadd.f32 0.0, %v1743
        %v1745 = vpop.f32.mrb[0].mxu0
        %1746 = vmatprep.mubr.f32.mxu0 0.0
        %1747 = vmatmul.mubr.f32.gmra.mrb[0].mxu0 %v1089
        %v1748 = vpop.f32.mrb[0].mxu0
        %v1749 = vadd.f32 0.0, %v1748
        %v1750 = vpop.f32.mrb[0].mxu0
        %1751 = vmatprep.mubr.f32.mxu0 0.0
        %1752 = vmatmul.mubr.f32.gmra.mrb[0].mxu0 %v1609
        %v1753 = vpop.f32.mrb[0].mxu0
        %v1754 = vadd.f32 0.0, %v1753
        %v1755 = vpop.f32.mrb[0].mxu0
        %1756 = vmatprep.mubr.f32.mxu0 0.0
        %1757 = vmatmul.mubr.f32.gmra.mrb[0].mxu0 %v1612
        %v1758 = vpop.f32.mrb[0].mxu0
        %v1759 = vadd.f32 0.0, %v1758
        %v1760 = vpop.f32.mrb[0].mxu0
        %1761 = vdwg.mxu0
        %v1762 = vadd.f32 %v1590, %v1684
        %v1763 = vadd.f32 %v1591, %v1689
        %v1764 = vadd.f32 %v1592, %v1694
        %v1765 = vadd.f32 %v1593, %v1699
        %v1766 = vadd.f32 %v1594, %v1704
        %v1767 = vadd.f32 %v1595, %v1709
        %v1768 = vadd.f32 %v1596, %v1714
        %v1769 = vadd.f32 %v1597, %v1719
        %v1770 = vadd.f32 %v1598, %v1724
        %v1771 = vadd.f32 %v1599, %v1729
        %v1772 = vadd.f32 %v1600, %v1734
        %v1773 = vadd.f32 %v1601, %v1739
        %v1774 = vadd.f32 %v1602, %v1744
        %v1775 = vadd.f32 %v1603, %v1749
        %v1776 = vadd.f32 %v1604, %v1754
        %v1777 = vadd.f32 %v1605, %v1759
        %v1779 = vrot.slane %v411, 1
        %v1780 = vrot.slane %v412, 1
        %v1781 = vsel %vm439, %v1779, %v1780
        %v1782 = vrot.slane %v413, 1
        %v1783 = vsel %vm439, %v1780, %v1782
        %s1784 = scalar_lea.vmem %s3, 28
        %v1785 = vld [vmem:[%s1784] sm:$0xf]
        %v1786 = vsel %vm482, %v1781, 0
        %v1788 = vsel %vm482, %v1783, 0
        %v1791 = vsel %vm515, %v1785, 0
        %1793 = vmatprep.subr.mxu0 0.0
        %1794 = vmatpush1.msra.mxu0 %v1791
        %1795 = vmatprep.subr.mxu0 0.0
        %1796 = vmatpush1.msra.mxu0 0.0
        %1797 = vmatprep.subr.mxu0 0.0
        %1798 = vmatpush1.msra.mxu0 0.0
        %1799 = vmatprep.subr.mxu0 0.0
        %1800 = vmatpush1.msra.mxu0 0.0
        %1801 = vmatprep.subr.mxu0 0.0
        %1802 = vmatpush1.msra.mxu0 0.0
        %1803 = vmatprep.subr.mxu0 0.0
        %1804 = vmatpush1.msra.mxu0 0.0
        %1805 = vmatprep.subr.mxu0 0.0
        %1806 = vmatpush1.msra.mxu0 0.0
        %1807 = vmatprep.subr.mxu0 0.0
        %1808 = vmatpush1.msra.mxu0 0.0
        %1809 = vmatprep.subr.mxu0 0.0
        %1810 = vmatpush1.msra.mxu0 0.0
        %1811 = vmatprep.subr.mxu0 0.0
        %1812 = vmatpush1.msra.mxu0 0.0
        %1813 = vmatprep.subr.mxu0 0.0
        %1814 = vmatpush1.msra.mxu0 0.0
        %1815 = vmatprep.subr.mxu0 0.0
        %1816 = vmatpush1.msra.mxu0 0.0
        %1817 = vmatprep.subr.mxu0 0.0
        %1818 = vmatpush1.msra.mxu0 0.0
        %1819 = vmatprep.subr.mxu0 0.0
        %1820 = vmatpush1.msra.mxu0 0.0
        %1821 = vmatprep.subr.mxu0 0.0
        %1822 = vmatpush1.msra.mxu0 0.0
        %1823 = vmatprep.subr.mxu0 0.0
        %1824 = vmatpush1.msra.mxu0 0.0
        %1825 = vmatprep.subr.mxu0 0.0
        %1826 = vmatpush1.msra.mxu0 0.0
        %1827 = vmatprep.subr.mxu0 0.0
        %1828 = vmatpush1.msra.mxu0 0.0
        %1829 = vmatprep.subr.mxu0 0.0
        %1830 = vmatpush1.msra.mxu0 0.0
        %1831 = vmatprep.subr.mxu0 0.0
        %1832 = vmatpush1.msra.mxu0 0.0
        %1833 = vmatprep.subr.mxu0 0.0
        %1834 = vmatpush1.msra.mxu0 0.0
        %1835 = vmatprep.subr.mxu0 0.0
        %1836 = vmatpush1.msra.mxu0 0.0
        %1837 = vmatprep.subr.mxu0 0.0
        %1838 = vmatpush1.msra.mxu0 0.0
        %1839 = vmatprep.subr.mxu0 0.0
        %1840 = vmatpush1.msra.mxu0 0.0
        %1841 = vmatprep.subr.mxu0 0.0
        %1842 = vmatpush1.msra.mxu0 0.0
        %1843 = vmatprep.subr.mxu0 0.0
        %1844 = vmatpush1.msra.mxu0 0.0
        %1845 = vmatprep.subr.mxu0 0.0
        %1846 = vmatpush1.msra.mxu0 0.0
        %1847 = vmatprep.subr.mxu0 0.0
        %1848 = vmatpush1.msra.mxu0 0.0
        %1849 = vmatprep.subr.mxu0 0.0
        %1850 = vmatpush1.msra.mxu0 0.0
        %1851 = vmatprep.subr.mxu0 0.0
        %1852 = vmatpush1.msra.mxu0 0.0
        %1853 = vmatprep.subr.mxu0 0.0
        %1854 = vmatpush1.msra.mxu0 0.0
        %1855 = vmatprep.subr.mxu0 0.0
        %1856 = vmatpush1.msra.mxu0 0.0
        %1857 = vmatprep.mubr.f32.mxu0 0.0
        %1858 = vmatmul.mubr.f32.gmra.mrb[0].mxu0 %v491
        %v1859 = vpop.f32.mrb[0].mxu0
        %v1860 = vadd.f32 0.0, %v1859
        %v1861 = vpop.f32.mrb[0].mxu0
        %1862 = vmatprep.mubr.f32.mxu0 0.0
        %1863 = vmatmul.mubr.f32.gmra.mrb[0].mxu0 %v493
        %v1864 = vpop.f32.mrb[0].mxu0
        %v1865 = vadd.f32 0.0, %v1864
        %v1866 = vpop.f32.mrb[0].mxu0
        %1867 = vmatprep.mubr.f32.mxu0 0.0
        %1868 = vmatmul.mubr.f32.gmra.mrb[0].mxu0 %v495
        %v1869 = vpop.f32.mrb[0].mxu0
        %v1870 = vadd.f32 0.0, %v1869
        %v1871 = vpop.f32.mrb[0].mxu0
        %1872 = vmatprep.mubr.f32.mxu0 0.0
        %1873 = vmatmul.mubr.f32.gmra.mrb[0].mxu0 %v497
        %v1874 = vpop.f32.mrb[0].mxu0
        %v1875 = vadd.f32 0.0, %v1874
        %v1876 = vpop.f32.mrb[0].mxu0
        %1877 = vmatprep.mubr.f32.mxu0 0.0
        %1878 = vmatmul.mubr.f32.gmra.mrb[0].mxu0 %v499
        %v1879 = vpop.f32.mrb[0].mxu0
        %v1880 = vadd.f32 0.0, %v1879
        %v1881 = vpop.f32.mrb[0].mxu0
        %1882 = vmatprep.mubr.f32.mxu0 0.0
        %1883 = vmatmul.mubr.f32.gmra.mrb[0].mxu0 %v501
        %v1884 = vpop.f32.mrb[0].mxu0
        %v1885 = vadd.f32 0.0, %v1884
        %v1886 = vpop.f32.mrb[0].mxu0
        %1887 = vmatprep.mubr.f32.mxu0 0.0
        %1888 = vmatmul.mubr.f32.gmra.mrb[0].mxu0 %v503
        %v1889 = vpop.f32.mrb[0].mxu0
        %v1890 = vadd.f32 0.0, %v1889
        %v1891 = vpop.f32.mrb[0].mxu0
        %1892 = vmatprep.mubr.f32.mxu0 0.0
        %1893 = vmatmul.mubr.f32.gmra.mrb[0].mxu0 %v505
        %v1894 = vpop.f32.mrb[0].mxu0
        %v1895 = vadd.f32 0.0, %v1894
        %v1896 = vpop.f32.mrb[0].mxu0
        %1897 = vmatprep.mubr.f32.mxu0 0.0
        %1898 = vmatmul.mubr.f32.gmra.mrb[0].mxu0 %v507
        %v1899 = vpop.f32.mrb[0].mxu0
        %v1900 = vadd.f32 0.0, %v1899
        %v1901 = vpop.f32.mrb[0].mxu0
        %1902 = vmatprep.mubr.f32.mxu0 0.0
        %1903 = vmatmul.mubr.f32.gmra.mrb[0].mxu0 %v509
        %v1904 = vpop.f32.mrb[0].mxu0
        %v1905 = vadd.f32 0.0, %v1904
        %v1906 = vpop.f32.mrb[0].mxu0
        %1907 = vmatprep.mubr.f32.mxu0 0.0
        %1908 = vmatmul.mubr.f32.gmra.mrb[0].mxu0 %v511
        %v1909 = vpop.f32.mrb[0].mxu0
        %v1910 = vadd.f32 0.0, %v1909
        %v1911 = vpop.f32.mrb[0].mxu0
        %1912 = vmatprep.mubr.f32.mxu0 0.0
        %1913 = vmatmul.mubr.f32.gmra.mrb[0].mxu0 %v513
        %v1914 = vpop.f32.mrb[0].mxu0
        %v1915 = vadd.f32 0.0, %v1914
        %v1916 = vpop.f32.mrb[0].mxu0
        %1917 = vmatprep.mubr.f32.mxu0 0.0
        %1918 = vmatmul.mubr.f32.gmra.mrb[0].mxu0 %v1263
        %v1919 = vpop.f32.mrb[0].mxu0
        %v1920 = vadd.f32 0.0, %v1919
        %v1921 = vpop.f32.mrb[0].mxu0
        %1922 = vmatprep.mubr.f32.mxu0 0.0
        %1923 = vmatmul.mubr.f32.gmra.mrb[0].mxu0 %v1265
        %v1924 = vpop.f32.mrb[0].mxu0
        %v1925 = vadd.f32 0.0, %v1924
        %v1926 = vpop.f32.mrb[0].mxu0
        %1927 = vmatprep.mubr.f32.mxu0 0.0
        %1928 = vmatmul.mubr.f32.gmra.mrb[0].mxu0 %v1786
        %v1929 = vpop.f32.mrb[0].mxu0
        %v1930 = vadd.f32 0.0, %v1929
        %v1931 = vpop.f32.mrb[0].mxu0
        %1932 = vmatprep.mubr.f32.mxu0 0.0
        %1933 = vmatmul.mubr.f32.gmra.mrb[0].mxu0 %v1788
        %v1934 = vpop.f32.mrb[0].mxu0
        %v1935 = vadd.f32 0.0, %v1934
        %v1936 = vpop.f32.mrb[0].mxu0
        %1937 = vdwg.mxu0
        %v1938 = vadd.f32 %v1762, %v1860
        %v1939 = vadd.f32 %v1763, %v1865
        %v1940 = vadd.f32 %v1764, %v1870
        %v1941 = vadd.f32 %v1765, %v1875
        %v1942 = vadd.f32 %v1766, %v1880
        %v1943 = vadd.f32 %v1767, %v1885
        %v1944 = vadd.f32 %v1768, %v1890
        %v1945 = vadd.f32 %v1769, %v1895
        %v1946 = vadd.f32 %v1770, %v1900
        %v1947 = vadd.f32 %v1771, %v1905
        %v1948 = vadd.f32 %v1772, %v1910
        %v1949 = vadd.f32 %v1773, %v1915
        %v1950 = vadd.f32 %v1774, %v1920
        %v1951 = vadd.f32 %v1775, %v1925
        %v1952 = vadd.f32 %v1776, %v1930
        %v1953 = vadd.f32 %v1777, %v1935
        %v1954 = vrot.slane %v411, 2
        %v1955 = vrot.slane %v412, 2
        %v1956 = vsel %vm844, %v1954, %v1955
        %v1957 = vrot.slane %v413, 2
        %v1958 = vsel %vm844, %v1955, %v1957
        %s1959 = scalar_lea.vmem %s3, 32
        %v1960 = vld [vmem:[%s1959] sm:$0xf]
        %v1961 = vsel %vm482, %v1956, 0
        %v1963 = vsel %vm482, %v1958, 0
        %v1966 = vsel %vm515, %v1960, 0
        %1968 = vmatprep.subr.mxu0 0.0
        %1969 = vmatpush1.msra.mxu0 %v1966
        %1970 = vmatprep.subr.mxu0 0.0
        %1971 = vmatpush1.msra.mxu0 0.0
        %1972 = vmatprep.subr.mxu0 0.0
        %1973 = vmatpush1.msra.mxu0 0.0
        %1974 = vmatprep.subr.mxu0 0.0
        %1975 = vmatpush1.msra.mxu0 0.0
        %1976 = vmatprep.subr.mxu0 0.0
        %1977 = vmatpush1.msra.mxu0 0.0
        %1978 = vmatprep.subr.mxu0 0.0
        %1979 = vmatpush1.msra.mxu0 0.0
        %1980 = vmatprep.subr.mxu0 0.0
        %1981 = vmatpush1.msra.mxu0 0.0
        %1982 = vmatprep.subr.mxu0 0.0
        %1983 = vmatpush1.msra.mxu0 0.0
        %1984 = vmatprep.subr.mxu0 0.0
        %1985 = vmatpush1.msra.mxu0 0.0
        %1986 = vmatprep.subr.mxu0 0.0
        %1987 = vmatpush1.msra.mxu0 0.0
        %1988 = vmatprep.subr.mxu0 0.0
        %1989 = vmatpush1.msra.mxu0 0.0
        %1990 = vmatprep.subr.mxu0 0.0
        %1991 = vmatpush1.msra.mxu0 0.0
        %1992 = vmatprep.subr.mxu0 0.0
        %1993 = vmatpush1.msra.mxu0 0.0
        %1994 = vmatprep.subr.mxu0 0.0
        %1995 = vmatpush1.msra.mxu0 0.0
        %1996 = vmatprep.subr.mxu0 0.0
        %1997 = vmatpush1.msra.mxu0 0.0
        %1998 = vmatprep.subr.mxu0 0.0
        %1999 = vmatpush1.msra.mxu0 0.0
        %2000 = vmatprep.subr.mxu0 0.0
        %2001 = vmatpush1.msra.mxu0 0.0
        %2002 = vmatprep.subr.mxu0 0.0
        %2003 = vmatpush1.msra.mxu0 0.0
        %2004 = vmatprep.subr.mxu0 0.0
        %2005 = vmatpush1.msra.mxu0 0.0
        %2006 = vmatprep.subr.mxu0 0.0
        %2007 = vmatpush1.msra.mxu0 0.0
        %2008 = vmatprep.subr.mxu0 0.0
        %2009 = vmatpush1.msra.mxu0 0.0
        %2010 = vmatprep.subr.mxu0 0.0
        %2011 = vmatpush1.msra.mxu0 0.0
        %2012 = vmatprep.subr.mxu0 0.0
        %2013 = vmatpush1.msra.mxu0 0.0
        %2014 = vmatprep.subr.mxu0 0.0
        %2015 = vmatpush1.msra.mxu0 0.0
        %2016 = vmatprep.subr.mxu0 0.0
        %2017 = vmatpush1.msra.mxu0 0.0
        %2018 = vmatprep.subr.mxu0 0.0
        %2019 = vmatpush1.msra.mxu0 0.0
        %2020 = vmatprep.subr.mxu0 0.0
        %2021 = vmatpush1.msra.mxu0 0.0
        %2022 = vmatprep.subr.mxu0 0.0
        %2023 = vmatpush1.msra.mxu0 0.0
        %2024 = vmatprep.subr.mxu0 0.0
        %2025 = vmatpush1.msra.mxu0 0.0
        %2026 = vmatprep.subr.mxu0 0.0
        %2027 = vmatpush1.msra.mxu0 0.0
        %2028 = vmatprep.subr.mxu0 0.0
        %2029 = vmatpush1.msra.mxu0 0.0
        %2030 = vmatprep.subr.mxu0 0.0
        %2031 = vmatpush1.msra.mxu0 0.0
        %2032 = vmatprep.mubr.f32.mxu0 0.0
        %2033 = vmatmul.mubr.f32.gmra.mrb[0].mxu0 %v895
        %v2034 = vpop.f32.mrb[0].mxu0
        %v2035 = vadd.f32 0.0, %v2034
        %v2036 = vpop.f32.mrb[0].mxu0
        %2037 = vmatprep.mubr.f32.mxu0 0.0
        %2038 = vmatmul.mubr.f32.gmra.mrb[0].mxu0 %v897
        %v2039 = vpop.f32.mrb[0].mxu0
        %v2040 = vadd.f32 0.0, %v2039
        %v2041 = vpop.f32.mrb[0].mxu0
        %2042 = vmatprep.mubr.f32.mxu0 0.0
        %2043 = vmatmul.mubr.f32.gmra.mrb[0].mxu0 %v899
        %v2044 = vpop.f32.mrb[0].mxu0
        %v2045 = vadd.f32 0.0, %v2044
        %v2046 = vpop.f32.mrb[0].mxu0
        %2047 = vmatprep.mubr.f32.mxu0 0.0
        %2048 = vmatmul.mubr.f32.gmra.mrb[0].mxu0 %v901
        %v2049 = vpop.f32.mrb[0].mxu0
        %v2050 = vadd.f32 0.0, %v2049
        %v2051 = vpop.f32.mrb[0].mxu0
        %2052 = vmatprep.mubr.f32.mxu0 0.0
        %2053 = vmatmul.mubr.f32.gmra.mrb[0].mxu0 %v903
        %v2054 = vpop.f32.mrb[0].mxu0
        %v2055 = vadd.f32 0.0, %v2054
        %v2056 = vpop.f32.mrb[0].mxu0
        %2057 = vmatprep.mubr.f32.mxu0 0.0
        %2058 = vmatmul.mubr.f32.gmra.mrb[0].mxu0 %v905
        %v2059 = vpop.f32.mrb[0].mxu0
        %v2060 = vadd.f32 0.0, %v2059
        %v2061 = vpop.f32.mrb[0].mxu0
        %2062 = vmatprep.mubr.f32.mxu0 0.0
        %2063 = vmatmul.mubr.f32.gmra.mrb[0].mxu0 %v907
        %v2064 = vpop.f32.mrb[0].mxu0
        %v2065 = vadd.f32 0.0, %v2064
        %v2066 = vpop.f32.mrb[0].mxu0
        %2067 = vmatprep.mubr.f32.mxu0 0.0
        %2068 = vmatmul.mubr.f32.gmra.mrb[0].mxu0 %v909
        %v2069 = vpop.f32.mrb[0].mxu0
        %v2070 = vadd.f32 0.0, %v2069
        %v2071 = vpop.f32.mrb[0].mxu0
        %2072 = vmatprep.mubr.f32.mxu0 0.0
        %2073 = vmatmul.mubr.f32.gmra.mrb[0].mxu0 %v911
        %v2074 = vpop.f32.mrb[0].mxu0
        %v2075 = vadd.f32 0.0, %v2074
        %v2076 = vpop.f32.mrb[0].mxu0
        %2077 = vmatprep.mubr.f32.mxu0 0.0
        %2078 = vmatmul.mubr.f32.gmra.mrb[0].mxu0 %v913
        %v2079 = vpop.f32.mrb[0].mxu0
        %v2080 = vadd.f32 0.0, %v2079
        %v2081 = vpop.f32.mrb[0].mxu0
        %2082 = vmatprep.mubr.f32.mxu0 0.0
        %2083 = vmatmul.mubr.f32.gmra.mrb[0].mxu0 %v915
        %v2084 = vpop.f32.mrb[0].mxu0
        %v2085 = vadd.f32 0.0, %v2084
        %v2086 = vpop.f32.mrb[0].mxu0
        %2087 = vmatprep.mubr.f32.mxu0 0.0
        %2088 = vmatmul.mubr.f32.gmra.mrb[0].mxu0 %v917
        %v2089 = vpop.f32.mrb[0].mxu0
        %v2090 = vadd.f32 0.0, %v2089
        %v2091 = vpop.f32.mrb[0].mxu0
        %2092 = vmatprep.mubr.f32.mxu0 0.0
        %2093 = vmatmul.mubr.f32.gmra.mrb[0].mxu0 %v1438
        %v2094 = vpop.f32.mrb[0].mxu0
        %v2095 = vadd.f32 0.0, %v2094
        %v2096 = vpop.f32.mrb[0].mxu0
        %2097 = vmatprep.mubr.f32.mxu0 0.0
        %2098 = vmatmul.mubr.f32.gmra.mrb[0].mxu0 %v1440
        %v2099 = vpop.f32.mrb[0].mxu0
        %v2100 = vadd.f32 0.0, %v2099
        %v2101 = vpop.f32.mrb[0].mxu0
        %2102 = vmatprep.mubr.f32.mxu0 0.0
        %2103 = vmatmul.mubr.f32.gmra.mrb[0].mxu0 %v1961
        %v2104 = vpop.f32.mrb[0].mxu0
        %v2105 = vadd.f32 0.0, %v2104
        %v2106 = vpop.f32.mrb[0].mxu0
        %2107 = vmatprep.mubr.f32.mxu0 0.0
        %2108 = vmatmul.mubr.f32.gmra.mrb[0].mxu0 %v1963
        %v2109 = vpop.f32.mrb[0].mxu0
        %v2110 = vadd.f32 0.0, %v2109
        %v2111 = vpop.f32.mrb[0].mxu0
        %2112 = vdwg.mxu0
        %v2113 = vadd.f32 %v1938, %v2035
        %v2114 = vadd.f32 %v1939, %v2040
        %v2115 = vadd.f32 %v1940, %v2045
        %v2116 = vadd.f32 %v1941, %v2050
        %v2117 = vadd.f32 %v1942, %v2055
        %v2118 = vadd.f32 %v1943, %v2060
        %v2119 = vadd.f32 %v1944, %v2065
        %v2120 = vadd.f32 %v1945, %v2070
        %v2121 = vadd.f32 %v1946, %v2075
        %v2122 = vadd.f32 %v1947, %v2080
        %v2123 = vadd.f32 %v1948, %v2085
        %v2124 = vadd.f32 %v1949, %v2090
        %v2125 = vadd.f32 %v1950, %v2095
        %v2126 = vadd.f32 %v1951, %v2100
        %v2127 = vadd.f32 %v1952, %v2105
        %v2128 = vadd.f32 %v1953, %v2110
        %v2129 = vld [vmem:[%s4] sm:$0x1]
        %v2131 = vlaneseq
        %v2132 = vshrl.u32 %v2131, 7
        %v2133 = vsub.s32 0, %v2132
        %v2134 = vrot.slane %v2129, %v2133
        %v2136 = vadd.f32 %v2113, %v2134
        %v2137 = vadd.f32 %v2114, %v2134
        %v2138 = vadd.f32 %v2115, %v2134
        %v2139 = vadd.f32 %v2116, %v2134
        %v2140 = vadd.f32 %v2117, %v2134
        %v2141 = vadd.f32 %v2118, %v2134
        %v2142 = vadd.f32 %v2119, %v2134
        %v2143 = vadd.f32 %v2120, %v2134
        %v2144 = vadd.f32 %v2121, %v2134
        %v2145 = vadd.f32 %v2122, %v2134
        %v2146 = vadd.f32 %v2123, %v2134
        %v2147 = vadd.f32 %v2124, %v2134
        %v2148 = vadd.f32 %v2125, %v2134
        %v2149 = vadd.f32 %v2126, %v2134
        %v2150 = vadd.f32 %v2127, %v2134
        %v2151 = vadd.f32 %v2128, %v2134
        %2152 = vxpose.xlu0.b32.start [1/16] %v2136, 128
        %2153 = vxpose.xlu0.b32.cont [2/16] %v2137, 128
        %2154 = vxpose.xlu0.b32.cont [3/16] %v2138, 128
        %2155 = vxpose.xlu0.b32.cont [4/16] %v2139, 128
        %2156 = vxpose.xlu0.b32.cont [5/16] %v2140, 128
        %2157 = vxpose.xlu0.b32.cont [6/16] %v2141, 128
        %2158 = vxpose.xlu0.b32.cont [7/16] %v2142, 128
        %2159 = vxpose.xlu0.b32.cont [8/16] %v2143, 128
        %2160 = vxpose.xlu0.b32.cont [9/16] %v2144, 128
        %2161 = vxpose.xlu0.b32.cont [10/16] %v2145, 128
        %2162 = vxpose.xlu0.b32.cont [11/16] %v2146, 128
        %2163 = vxpose.xlu0.b32.cont [12/16] %v2147, 128
        %2164 = vxpose.xlu0.b32.cont [13/16] %v2148, 128
        %2165 = vxpose.xlu0.b32.cont [14/16] %v2149, 128
        %2166 = vxpose.xlu0.b32.cont [15/16] %v2150, 128
        %2167 = vxpose.xlu0.b32.end [16/16] %v2151, 128
        %v2168 = vpop.trf.xlu0
        %v2169 = vpop.trf.xlu0
        %v2170 = vpop.trf.xlu0
        %v2171 = vpop.trf.xlu0
        %v2172 = vpop.trf.xlu0
        %v2173 = vpop.trf.xlu0
        %v2174 = vpop.trf.xlu0
        %v2175 = vpop.trf.xlu0
        %v2176 = vpop.trf.xlu0
        %v2177 = vpop.trf.xlu0
        %v2178 = vpop.trf.xlu0
        %v2179 = vpop.trf.xlu0
        %v2180 = vpop.trf.xlu0
        %v2181 = vpop.trf.xlu0
        %v2182 = vpop.trf.xlu0
        %v2183 = vpop.trf.xlu0
        %2184 = vst [vmem:[%s334] sm:$0xff] %v2168
        %s2185 = sand.u32 %s177, 1
        %s2186 = scalar_lea.sflag [#allocation3], %s2185
        %s2187 = sand.u32 %s177, 1
        %s2188 = smul.addr %s2187, 8
        %s2189 = scalar_lea.vmem [#allocation2], %s2188
        // Predicated region
        $region41: #{tpu_custom_call.1} parent=39 // pred_check
          %p2190 = pneg %p187
        $region42: #{tpu_custom_call.1} parent=39 // pred_check_branch
          %2192 = sbr.rel (%p2190) target = $region44
        $region43: #{tpu_custom_call.1} parent=39 // pred_region
          %s2194 = ssub.s32 128, 128
          %2195 = vsyncadd %s2186, %s2194
          %s2196 = smul.addr %s23, 2
          %s2197 = sadd.s32 %s24, %s2196
          %s2198 = smul.addr %s2197, 128
          %s2199 = scalar_lea.hbm %s5, %s2198
          %s2201 = sshll.u32 %s2189, 4
          %s2202 = int_to_ptr.vmem [resolvable:$true] %s2201
          %2204 = dma.vmem_to_hbm [thread:$0]  %s2202, 128, %s2199, %s2186
        $region44: #{tpu_custom_call.1} parent=39 // pred_fallthru
          _
      $region40: #{tpu_custom_call.1} parent=5 // pred_fallthru
        _
      %p2205 = scmp.le.s32.totalorder 2, %s14
      // Predicated region
      $region45: #{tpu_custom_call.1} parent=5 // pred_check
        %p2206 = pneg %p2205
      $region46: #{tpu_custom_call.1} parent=5 // pred_check_branch
        %2208 = sbr.rel (%p2206) target = $region48
      $region47: #{tpu_custom_call.1} parent=5 // pred_region
        %s2209 = ssub.s32 %s14, 2
        // Predicated region
        $region49: #{tpu_custom_call.1} parent=47 // pred_check
          %p2210 = pneg %p193
        $region50: #{tpu_custom_call.1} parent=47 // pred_check_branch
          %2212 = sbr.rel (%p2210) target = $region52
        $region51: #{tpu_custom_call.1} parent=47 // pred_region
          %s2213 = sand.u32 %s178, 1
          %s2214 = scalar_lea.sflag [#allocation3], %s2213
          %s2215 = sand.u32 %s178, 1
          %s2216 = smul.addr %s2215, 8
          %s2217 = scalar_lea.vmem [#allocation2], %s2216
          %2218 = dma.done %s2214, 128
        $region52: #{tpu_custom_call.1} parent=47 // pred_fallthru
          _
      $region48: #{tpu_custom_call.1} parent=5 // pred_fallthru
        _
    $region6: #{tpu_custom_call.1} parent=1 // loop_footer
      %s18 = sadd.s32 1, %s14
    $region7: #{tpu_custom_call.1} parent=1 // loop_footer_branch
      %13 = sbr.rel target = $region3
    $region8: #{tpu_custom_call.1} parent=1 // loop_exit
      _
    %2219 = vsyncpa [#allocation3], 1
    %s2220 = scalar_lea.sflag [#allocation3], 1
    %2221 = vsyncpa %s2220, 1

</llo_original>
